<compile_context>
chip_gen: v6e
topology: v6e:2x2x1
jax: 0.10.0
libtpu: 0.0.40
codegen_flags: <defaults>
</compile_context>

<pallas_src>
import jax
import jax.numpy as jnp
from jax.experimental import pallas as pl
from jax.experimental.pallas import tpu as pltpu


# ----------------------------------------------------------------------------- kernel
def lossnet_kernel(f1_ref, f2_ref, f3_ref, f4_ref,
                   w1_ref, w2_ref, w3_ref, w4_ref,
                   fcb_ref, wf_ref, bf_ref, out_ref):
    def branch(i, f_ref, w_ref):
        # GAP: sublane sum over the zero-padded spatial axis with f32 accumulation.
        # (The exact 1/S scaling is folded into w_ref in the wrapper.)
        g = jnp.sum(f_ref[...].astype(jnp.float32), axis=1)            # (bt, C_eff) f32
        # FC + bias + ReLU: bf16 MXU operands, f32 accumulation & elementwise.
        h = jnp.maximum(
            jnp.dot(g.astype(w_ref.dtype), w_ref[...],
                    preferred_element_type=jnp.float32) + fcb_ref[i:i + 1, :],
            0.0)                                                         # (bt, D) f32
        # Final Linear partial (replaces concat + N=1 MXU dot): VPU mul + lane reduce.
        return jnp.sum(h * wf_ref[i:i + 1, :], axis=-1, keepdims=True)  # (bt, 1) f32

    acc = branch(0, f1_ref, w1_ref)
    acc = acc + branch(1, f2_ref, w2_ref)
    acc = acc + branch(2, f3_ref, w3_ref)
    acc = acc + branch(3, f4_ref, w4_ref)
    out_ref[...] = (acc + bf_ref[0]).astype(out_ref.dtype)


# ----------------------------------------------------------------------------- wrapper
def _prep_scale(f, w, compute_dtype):
    """NCHW features + (C, D) FC weight -> lane-dense (B, S_pad, C_eff) block and the
    matching FC weight with the exact 1/S GAP scaling folded in."""
    B, C, H, W = f.shape
    S = H * W
    x = jnp.transpose(f, (0, 2, 3, 1)).reshape(B, S, C)
    w_eff = w.astype(jnp.float32) * (1.0 / float(S))   # fold exact mean into the weight
    # Lane-pack narrow-channel scales: fold spatial pairs into the lane axis so the
    # dominant feature DMA uses all 128 lanes (sum_even@W + sum_odd@W == sum@W).
    pack = 1
    while C * pack < 128 and S % (2 * pack) == 0:
        pack *= 2
    if pack > 1:
        x = x.reshape(B, S // pack, pack * C)
        w_eff = jnp.concatenate([w_eff] * pack, axis=0)
        S, C = S // pack, pack * C
    # Zero-pad spatial to a sublane multiple; the zeros do not change the sum.
    S_pad = -(-S // 8) * 8
    if S_pad != S:
        x = jnp.pad(x, ((0, 0), (0, S_pad - S), (0, 0)))
    return x.astype(compute_dtype), w_eff.astype(compute_dtype)


def _vmem_capacity_bytes():
    # Physical per-TensorCore VMEM; used to budget tiles and set vmem_limit_bytes.
    try:
        cap = getattr(pltpu.get_tpu_info(), "vmem_capacity_bytes", None)
        if cap:
            return int(cap)
    except Exception:
        pass
    return 64 * 1024 * 1024   # conservative default (v7x per-TC VMEM)


def _pick_batch_tile(B, per_sample_bytes, fixed_bytes, budget_bytes):
    def fits(bt):
        return fixed_bytes + bt * per_sample_bytes <= budget_bytes
    if fits(B):
        return B                      # one fat step: least per-step overhead
    # Tiled path: the (bt, 1) output block needs bt to be a sublane multiple.
    for bt in (256, 128, 64, 32, 16, 8):
        if B % bt == 0 and fits(bt):
            return bt
    # TODO(synk): pad awkward batch sizes to a multiple of 8 instead of falling back.
    return B


def lossnet_forward(features, params, compute_dtype=jnp.bfloat16):
    """features: list of 4 NCHW arrays; params: (C, D) FC weights, (1, D) FC biases,
    (4D, 1) final weight, (1, 1) final bias (PyTorch Linear stored transposed)."""
    B = features[0].shape[0]
    D = params["w1"].shape[1]

    flat, ws = [], []
    for i, f in enumerate(features):
        x, w = _prep_scale(f, params[f"w{i + 1}"], compute_dtype)
        flat.append(x)
        ws.append(w)

    fcb = jnp.concatenate([params[f"b{i}"] for i in range(1, 5)], axis=0).astype(jnp.float32)  # (4, D)
    wf_rows = params["wf"].reshape(4, D).astype(jnp.float32)                                    # (4, D)
    bf = params["bf"].reshape(1).astype(jnp.float32)                                            # SMEM scalar

    # --- VMEM-aware batch tiling + explicit VMEM limit --------------------------------
    feat_bytes_per_sample = sum(x.shape[1] * x.shape[2] * x.dtype.itemsize for x in flat)
    # double-buffered bf16 feature DMAs + worst-case f32 cast temporaries of the GAP reduce
    per_sample_bytes = 2 * feat_bytes_per_sample + 2 * feat_bytes_per_sample
    fixed_bytes = (sum(int(w.size) * w.dtype.itemsize for w in ws)
                   + int(fcb.size) * 4 + int(wf_rows.size) * 4 + (1 << 20))
    vmem_cap = _vmem_capacity_bytes()
    bt = _pick_batch_tile(B, per_sample_bytes, fixed_bytes, int(vmem_cap * 0.55))
    n_steps = B // bt
    vmem_limit = int(min(vmem_cap * 9 // 10,
                         max(fixed_bytes + bt * per_sample_bytes + (8 << 20), 32 << 20)))

    def const_spec(a):  # VMEM-resident, same block every grid step
        return pl.BlockSpec(a.shape, lambda i, _nd=a.ndim: (0,) * _nd)

    feat_specs = [pl.BlockSpec((bt,) + x.shape[1:], lambda i: (i, 0, 0)) for x in flat]

    in_specs = (feat_specs
                + [const_spec(w) for w in ws]
                + [const_spec(fcb), const_spec(wf_rows)]
                + [pl.BlockSpec(memory_space=pltpu.MemorySpace.SMEM)])

    # Bandwidth-bound cost hint so XLA overlaps the feature producer with this call.
    flops = sum(2 * B * x.shape[1] * x.shape[2]   # GAP sums
                + 2 * B * x.shape[2] * D          # FC
                + 2 * B * D                       # final linear partial
                for x in flat)
    bytes_accessed = (sum(int(x.size) * x.dtype.itemsize for x in flat)
                      + sum(int(w.size) * w.dtype.itemsize for w in ws)
                      + int(fcb.size) * 4 + int(wf_rows.size) * 4 + B * 4 + 4)
    cost = pl.CostEstimate(flops=int(flops), transcendentals=0,
                           bytes_accessed=int(bytes_accessed))

    out = pl.pallas_call(
        lossnet_kernel,
        out_shape=jax.ShapeDtypeStruct((B, 1), jnp.float32),
        grid=(n_steps,),
        in_specs=in_specs,
        out_specs=pl.BlockSpec((bt, 1), lambda i: (i, 0)),
        compiler_params=pltpu.CompilerParams(
            dimension_semantics=("parallel",),
            vmem_limit_bytes=vmem_limit),
        cost_estimate=cost,
    )(*flat, *ws, fcb, wf_rows, bf)
    return out


# ----------------------------------------------------------------------------- test utils
def make_params(key, num_channels, interm_dim):
    """Deterministic synthetic parameters (PyTorch Linear is (out,in); stored transposed)."""
    ks = jax.random.split(key, 10)
    params = {}
    for i, c in enumerate(num_channels):
        w = jax.random.normal(ks[2 * i], (c, interm_dim), jnp.float32) * (1.0 / jnp.sqrt(c))
        b = jax.random.normal(ks[2 * i + 1], (1, interm_dim), jnp.float32) * 0.01
        params[f"w{i + 1}"] = w
        params[f"b{i + 1}"] = b
    d = 4 * interm_dim
    params["wf"] = jax.random.normal(ks[8], (d, 1), jnp.float32) * (1.0 / jnp.sqrt(d))
    params["bf"] = jax.random.normal(ks[9], (1, 1), jnp.float32) * 0.01
    return params


def reference_forward(features, params):
    outs = []
    for i, f in enumerate(features):
        g = jnp.mean(f, axis=(2, 3))                             # GAP + flatten
        h = jnp.maximum(g @ params[f"w{i + 1}"] + params[f"b{i + 1}"], 0.0)
        outs.append(h)
    cat = jnp.concatenate(outs, axis=1)
    return cat @ params["wf"] + params["bf"]


if __name__ == "__main__":
    feature_sizes = [28, 14, 7, 4]
    num_channels = [64, 128, 256, 512]
    interm_dim = 128
    B = 2

    key = jax.random.PRNGKey(0)
    k_feat, k_par = jax.random.split(key)
    fkeys = jax.random.split(k_feat, 4)
    features = [
        jax.random.normal(fkeys[i], (B, num_channels[i], feature_sizes[i], feature_sizes[i]),
                          jnp.float32)
        for i in range(4)
    ]
    params = make_params(k_par, num_channels, interm_dim)

    out = jax.block_until_ready(lossnet_forward(features, params))
    ref = reference_forward(features, params)
    assert out.shape == (B, 1), out.shape
    # bf16 matmul operands (f32 accumulation) -> compare against the f32 reference
    # with a bf16-appropriate tolerance.
    assert jnp.allclose(out, ref, atol=2e-2, rtol=2e-2), (out, ref)

    print("KERNEL_OK")
</pallas_src>

<mosaic_0001>
module attributes {stable_mosaic.version = 11 : i64} {
  func.func @lossnet_kernel(%arg0: i32, %arg1: memref<2x392x128xbf16, #tpu.memory_space<vmem>>, %arg2: memref<2x200x128xbf16, #tpu.memory_space<vmem>>, %arg3: memref<2x56x256xbf16, #tpu.memory_space<vmem>>, %arg4: memref<2x16x512xbf16, #tpu.memory_space<vmem>>, %arg5: memref<128x128xbf16, #tpu.memory_space<vmem>>, %arg6: memref<128x128xbf16, #tpu.memory_space<vmem>>, %arg7: memref<256x128xbf16, #tpu.memory_space<vmem>>, %arg8: memref<512x128xbf16, #tpu.memory_space<vmem>>, %arg9: memref<4x128xf32, #tpu.memory_space<vmem>>, %arg10: memref<4x128xf32, #tpu.memory_space<vmem>>, %arg11: memref<1xf32, #tpu.memory_space<smem>>, %arg12: memref<2x1xf32, #tpu.memory_space<vmem>>) attributes {dimension_semantics = [#tpu.dimension_semantics<parallel>], iteration_bounds = array<i64: 1>, scalar_prefetch = 0 : i64, scratch_operands = 0 : i64, tpu.core_type = #tpu.core_type<tc>, window_params = [{transform_indices = @transform_0, window_bounds = array<i64: 2, 392, 128>}, {transform_indices = @transform_1, window_bounds = array<i64: 2, 200, 128>}, {transform_indices = @transform_2, window_bounds = array<i64: 2, 56, 256>}, {transform_indices = @transform_3, window_bounds = array<i64: 2, 16, 512>}, {pipeline_mode = #tpu.pipeline_mode<synchronous>, transform_indices = @transform_4, window_bounds = array<i64: 128, 128>}, {pipeline_mode = #tpu.pipeline_mode<synchronous>, transform_indices = @transform_5, window_bounds = array<i64: 128, 128>}, {pipeline_mode = #tpu.pipeline_mode<synchronous>, transform_indices = @transform_6, window_bounds = array<i64: 256, 128>}, {pipeline_mode = #tpu.pipeline_mode<synchronous>, transform_indices = @transform_7, window_bounds = array<i64: 512, 128>}, {pipeline_mode = #tpu.pipeline_mode<synchronous>, transform_indices = @transform_8, window_bounds = array<i64: 4, 128>}, {pipeline_mode = #tpu.pipeline_mode<synchronous>, transform_indices = @transform_9, window_bounds = array<i64: 4, 128>}, {transform_indices = @transform_10, window_bounds = array<i64: 1>}, {transform_indices = @transform_11, window_bounds = array<i64: 2, 1>}]} {
    %c0 = arith.constant 0 : index
    %c0_0 = arith.constant 0 : index
    %c0_1 = arith.constant 0 : index
    %0 = vector.load %arg1[%c0, %c0_0, %c0_1] : memref<2x392x128xbf16, #tpu.memory_space<vmem>>, vector<2x392x128xbf16>
    %1 = arith.extf %0 : vector<2x392x128xbf16> to vector<2x392x128xf32>
    %cst = arith.constant dense<0.000000e+00> : vector<2x128xf32>
    %2 = vector.multi_reduction <add>, %1, %cst [1] : vector<2x392x128xf32> to vector<2x128xf32>
    %3 = arith.truncf %2 : vector<2x128xf32> to vector<2x128xbf16>
    %c0_2 = arith.constant 0 : index
    %c0_3 = arith.constant 0 : index
    %4 = vector.load %arg5[%c0_2, %c0_3] : memref<128x128xbf16, #tpu.memory_space<vmem>>, vector<128x128xbf16>
    %cst_4 = arith.constant dense<0.000000e+00> : vector<2x128xf32>
    %5 = tpu.matmul %3, %4, %cst_4 {dimension_numbers = #tpu.dot_dimension_numbers<[1], [0], [0], [1], [0, 0, 1, 1], [], []>} : vector<2x128xbf16>, vector<128x128xbf16>, vector<2x128xf32> -> vector<2x128xf32>
    %c0_5 = arith.constant 0 : index
    %c0_6 = arith.constant 0 : index
    %6 = vector.load %arg9[%c0_5, %c0_6] : memref<4x128xf32, #tpu.memory_space<vmem>>, vector<1x128xf32>
    %7 = vector.broadcast %6 : vector<1x128xf32> to vector<2x128xf32>
    %8 = arith.addf %5, %7 : vector<2x128xf32>
    %cst_7 = arith.constant 0.000000e+00 : f32
    %9 = vector.broadcast %cst_7 : f32 to vector<2x128xf32>
    %10 = arith.maximumf %8, %9 : vector<2x128xf32>
    %c0_8 = arith.constant 0 : index
    %c0_9 = arith.constant 0 : index
    %11 = vector.load %arg10[%c0_8, %c0_9] : memref<4x128xf32, #tpu.memory_space<vmem>>, vector<1x128xf32>
    %12 = vector.broadcast %11 : vector<1x128xf32> to vector<2x128xf32>
    %13 = arith.mulf %10, %12 : vector<2x128xf32>
    %cst_10 = arith.constant dense<0.000000e+00> : vector<2xf32>
    %14 = vector.multi_reduction <add>, %13, %cst_10 [1] : vector<2x128xf32> to vector<2xf32>
    %15 = vector.shape_cast %14 : vector<2xf32> to vector<2x1xf32>
    %c0_11 = arith.constant 0 : index
    %c0_12 = arith.constant 0 : index
    %c0_13 = arith.constant 0 : index
    %16 = vector.load %arg2[%c0_11, %c0_12, %c0_13] : memref<2x200x128xbf16, #tpu.memory_space<vmem>>, vector<2x200x128xbf16>
    %17 = arith.extf %16 : vector<2x200x128xbf16> to vector<2x200x128xf32>
    %cst_14 = arith.constant dense<0.000000e+00> : vector<2x128xf32>
    %18 = vector.multi_reduction <add>, %17, %cst_14 [1] : vector<2x200x128xf32> to vector<2x128xf32>
    %19 = arith.truncf %18 : vector<2x128xf32> to vector<2x128xbf16>
    %c0_15 = arith.constant 0 : index
    %c0_16 = arith.constant 0 : index
    %20 = vector.load %arg6[%c0_15, %c0_16] : memref<128x128xbf16, #tpu.memory_space<vmem>>, vector<128x128xbf16>
    %cst_17 = arith.constant dense<0.000000e+00> : vector<2x128xf32>
    %21 = tpu.matmul %19, %20, %cst_17 {dimension_numbers = #tpu.dot_dimension_numbers<[1], [0], [0], [1], [0, 0, 1, 1], [], []>} : vector<2x128xbf16>, vector<128x128xbf16>, vector<2x128xf32> -> vector<2x128xf32>
    %c1 = arith.constant 1 : index
    %c0_18 = arith.constant 0 : index
    %22 = vector.load %arg9[%c1, %c0_18] : memref<4x128xf32, #tpu.memory_space<vmem>>, vector<1x128xf32>
    %23 = vector.broadcast %22 : vector<1x128xf32> to vector<2x128xf32>
    %24 = arith.addf %21, %23 : vector<2x128xf32>
    %cst_19 = arith.constant 0.000000e+00 : f32
    %25 = vector.broadcast %cst_19 : f32 to vector<2x128xf32>
    %26 = arith.maximumf %24, %25 : vector<2x128xf32>
    %c1_20 = arith.constant 1 : index
    %c0_21 = arith.constant 0 : index
    %27 = vector.load %arg10[%c1_20, %c0_21] : memref<4x128xf32, #tpu.memory_space<vmem>>, vector<1x128xf32>
    %28 = vector.broadcast %27 : vector<1x128xf32> to vector<2x128xf32>
    %29 = arith.mulf %26, %28 : vector<2x128xf32>
    %cst_22 = arith.constant dense<0.000000e+00> : vector<2xf32>
    %30 = vector.multi_reduction <add>, %29, %cst_22 [1] : vector<2x128xf32> to vector<2xf32>
    %31 = vector.shape_cast %30 : vector<2xf32> to vector<2x1xf32>
    %32 = arith.addf %15, %31 : vector<2x1xf32>
    %c0_23 = arith.constant 0 : index
    %c0_24 = arith.constant 0 : index
    %c0_25 = arith.constant 0 : index
    %33 = vector.load %arg3[%c0_23, %c0_24, %c0_25] : memref<2x56x256xbf16, #tpu.memory_space<vmem>>, vector<2x56x256xbf16>
    %34 = arith.extf %33 : vector<2x56x256xbf16> to vector<2x56x256xf32>
    %cst_26 = arith.constant dense<0.000000e+00> : vector<2x256xf32>
    %35 = vector.multi_reduction <add>, %34, %cst_26 [1] : vector<2x56x256xf32> to vector<2x256xf32>
    %36 = arith.truncf %35 : vector<2x256xf32> to vector<2x256xbf16>
    %c0_27 = arith.constant 0 : index
    %c0_28 = arith.constant 0 : index
    %37 = vector.load %arg7[%c0_27, %c0_28] : memref<256x128xbf16, #tpu.memory_space<vmem>>, vector<256x128xbf16>
    %cst_29 = arith.constant dense<0.000000e+00> : vector<2x128xf32>
    %38 = tpu.matmul %36, %37, %cst_29 {dimension_numbers = #tpu.dot_dimension_numbers<[1], [0], [0], [1], [0, 0, 1, 1], [], []>} : vector<2x256xbf16>, vector<256x128xbf16>, vector<2x128xf32> -> vector<2x128xf32>
    %c2 = arith.constant 2 : index
    %c0_30 = arith.constant 0 : index
    %39 = vector.load %arg9[%c2, %c0_30] : memref<4x128xf32, #tpu.memory_space<vmem>>, vector<1x128xf32>
    %40 = vector.broadcast %39 : vector<1x128xf32> to vector<2x128xf32>
    %41 = arith.addf %38, %40 : vector<2x128xf32>
    %cst_31 = arith.constant 0.000000e+00 : f32
    %42 = vector.broadcast %cst_31 : f32 to vector<2x128xf32>
    %43 = arith.maximumf %41, %42 : vector<2x128xf32>
    %c2_32 = arith.constant 2 : index
    %c0_33 = arith.constant 0 : index
    %44 = vector.load %arg10[%c2_32, %c0_33] : memref<4x128xf32, #tpu.memory_space<vmem>>, vector<1x128xf32>
    %45 = vector.broadcast %44 : vector<1x128xf32> to vector<2x128xf32>
    %46 = arith.mulf %43, %45 : vector<2x128xf32>
    %cst_34 = arith.constant dense<0.000000e+00> : vector<2xf32>
    %47 = vector.multi_reduction <add>, %46, %cst_34 [1] : vector<2x128xf32> to vector<2xf32>
    %48 = vector.shape_cast %47 : vector<2xf32> to vector<2x1xf32>
    %49 = arith.addf %32, %48 : vector<2x1xf32>
    %c0_35 = arith.constant 0 : index
    %c0_36 = arith.constant 0 : index
    %c0_37 = arith.constant 0 : index
    %50 = vector.load %arg4[%c0_35, %c0_36, %c0_37] : memref<2x16x512xbf16, #tpu.memory_space<vmem>>, vector<2x16x512xbf16>
    %51 = arith.extf %50 : vector<2x16x512xbf16> to vector<2x16x512xf32>
    %cst_38 = arith.constant dense<0.000000e+00> : vector<2x512xf32>
    %52 = vector.multi_reduction <add>, %51, %cst_38 [1] : vector<2x16x512xf32> to vector<2x512xf32>
    %53 = arith.truncf %52 : vector<2x512xf32> to vector<2x512xbf16>
    %c0_39 = arith.constant 0 : index
    %c0_40 = arith.constant 0 : index
    %54 = vector.load %arg8[%c0_39, %c0_40] : memref<512x128xbf16, #tpu.memory_space<vmem>>, vector<512x128xbf16>
    %cst_41 = arith.constant dense<0.000000e+00> : vector<2x128xf32>
    %55 = tpu.matmul %53, %54, %cst_41 {dimension_numbers = #tpu.dot_dimension_numbers<[1], [0], [0], [1], [0, 0, 1, 1], [], []>} : vector<2x512xbf16>, vector<512x128xbf16>, vector<2x128xf32> -> vector<2x128xf32>
    %c3 = arith.constant 3 : index
    %c0_42 = arith.constant 0 : index
    %56 = vector.load %arg9[%c3, %c0_42] : memref<4x128xf32, #tpu.memory_space<vmem>>, vector<1x128xf32>
    %57 = vector.broadcast %56 : vector<1x128xf32> to vector<2x128xf32>
    %58 = arith.addf %55, %57 : vector<2x128xf32>
    %cst_43 = arith.constant 0.000000e+00 : f32
    %59 = vector.broadcast %cst_43 : f32 to vector<2x128xf32>
    %60 = arith.maximumf %58, %59 : vector<2x128xf32>
    %c3_44 = arith.constant 3 : index
    %c0_45 = arith.constant 0 : index
    %61 = vector.load %arg10[%c3_44, %c0_45] : memref<4x128xf32, #tpu.memory_space<vmem>>, vector<1x128xf32>
    %62 = vector.broadcast %61 : vector<1x128xf32> to vector<2x128xf32>
    %63 = arith.mulf %60, %62 : vector<2x128xf32>
    %cst_46 = arith.constant dense<0.000000e+00> : vector<2xf32>
    %64 = vector.multi_reduction <add>, %63, %cst_46 [1] : vector<2x128xf32> to vector<2xf32>
    %65 = vector.shape_cast %64 : vector<2xf32> to vector<2x1xf32>
    %66 = arith.addf %49, %65 : vector<2x1xf32>
    %c0_47 = arith.constant 0 : index
    %67 = memref.load %arg11[%c0_47] : memref<1xf32, #tpu.memory_space<smem>>
    %68 = vector.broadcast %67 : f32 to vector<2x1xf32>
    %69 = arith.addf %66, %68 : vector<2x1xf32>
    %c0_48 = arith.constant 0 : index
    %c0_49 = arith.constant 0 : index
    %70 = vector.load %arg12[%c0_48, %c0_49] : memref<2x1xf32, #tpu.memory_space<vmem>>, vector<2x1xf32>
    tpu.vector_store %arg12[%c0_48, %c0_49], %69 {strides = array<i32>} : memref<2x1xf32, #tpu.memory_space<vmem>>, vector<2x1xf32>,
    return
  }
  func.func @transform_0(%arg0: i32) -> (i32, i32, i32) {
    %c0_i32 = arith.constant 0 : i32
    %c0_i32_0 = arith.constant 0 : i32
    %c0_i32_1 = arith.constant 0 : i32
    return %arg0, %c0_i32, %c0_i32_0 : i32, i32, i32
  }
  func.func @transform_1(%arg0: i32) -> (i32, i32, i32) {
    %c0_i32 = arith.constant 0 : i32
    %c0_i32_0 = arith.constant 0 : i32
    %c0_i32_1 = arith.constant 0 : i32
    return %arg0, %c0_i32, %c0_i32_0 : i32, i32, i32
  }
  func.func @transform_2(%arg0: i32) -> (i32, i32, i32) {
    %c0_i32 = arith.constant 0 : i32
    %c0_i32_0 = arith.constant 0 : i32
    %c0_i32_1 = arith.constant 0 : i32
    return %arg0, %c0_i32, %c0_i32_0 : i32, i32, i32
  }
  func.func @transform_3(%arg0: i32) -> (i32, i32, i32) {
    %c0_i32 = arith.constant 0 : i32
    %c0_i32_0 = arith.constant 0 : i32
    %c0_i32_1 = arith.constant 0 : i32
    return %arg0, %c0_i32, %c0_i32_0 : i32, i32, i32
  }
  func.func @transform_4(%arg0: i32) -> (i32, i32) {
    %c0_i32 = arith.constant 0 : i32
    %c0_i32_0 = arith.constant 0 : i32
    %c0_i32_1 = arith.constant 0 : i32
    return %c0_i32, %c0_i32_0 : i32, i32
  }
  func.func @transform_5(%arg0: i32) -> (i32, i32) {
    %c0_i32 = arith.constant 0 : i32
    %c0_i32_0 = arith.constant 0 : i32
    %c0_i32_1 = arith.constant 0 : i32
    return %c0_i32, %c0_i32_0 : i32, i32
  }
  func.func @transform_6(%arg0: i32) -> (i32, i32) {
    %c0_i32 = arith.constant 0 : i32
    %c0_i32_0 = arith.constant 0 : i32
    %c0_i32_1 = arith.constant 0 : i32
    return %c0_i32, %c0_i32_0 : i32, i32
  }
  func.func @transform_7(%arg0: i32) -> (i32, i32) {
    %c0_i32 = arith.constant 0 : i32
    %c0_i32_0 = arith.constant 0 : i32
    %c0_i32_1 = arith.constant 0 : i32
    return %c0_i32, %c0_i32_0 : i32, i32
  }
  func.func @transform_8(%arg0: i32) -> (i32, i32) {
    %c0_i32 = arith.constant 0 : i32
    %c0_i32_0 = arith.constant 0 : i32
    %c0_i32_1 = arith.constant 0 : i32
    return %c0_i32, %c0_i32_0 : i32, i32
  }
  func.func @transform_9(%arg0: i32) -> (i32, i32) {
    %c0_i32 = arith.constant 0 : i32
    %c0_i32_0 = arith.constant 0 : i32
    %c0_i32_1 = arith.constant 0 : i32
    return %c0_i32, %c0_i32_0 : i32, i32
  }
  func.func @transform_10(%arg0: i32) -> i32 {
    %c0_i32 = arith.constant 0 : i32
    %c0_i32_0 = arith.constant 0 : i32
    return %c0_i32 : i32
  }
  func.func @transform_11(%arg0: i32) -> (i32, i32) {
    %c0_i32 = arith.constant 0 : i32
    %c0_i32_0 = arith.constant 0 : i32
    return %arg0, %c0_i32 : i32, i32
  }
}

</mosaic_0001>

<llo_original>
// kernel: tpu_custom_call.1
$region0: #{tpu_custom_call.1}
  #allocation0 [shape = 'u32[]', space=smem, size = 0x4, offset = 0x4, fixed_abs, tag = 'smem constant byte address 0x4 - core index']
  #allocation1 [shape = 'u32[144,128]{1,0:T(1,128)}', space=vmem, size = 0x12000, scoped, tag = 'internal scratch']
  #allocation2 [shape = 'f32[1]{0:T(128)S(6)}', space=smem, size = 0x200, scoped, tag = 'scoped memory for tpu_custom_call.1']
  %s0 = inlined_call_operand.hbm [shape: bf16[2,392,128], index: 0, kind: input, shape index: {}]
  %s1 = inlined_call_operand.hbm [shape: bf16[2,200,128], index: 1, kind: input, shape index: {}]
  %s2 = inlined_call_operand.hbm [shape: bf16[2,56,256], index: 2, kind: input, shape index: {}]
  %s3 = inlined_call_operand.hbm [shape: bf16[2,16,512], index: 3, kind: input, shape index: {}]
  %s4 = inlined_call_operand.hbm [shape: bf16[128,128], index: 4, kind: input, shape index: {}]
  %s5 = inlined_call_operand.hbm [shape: bf16[128,128], index: 5, kind: input, shape index: {}]
  %s6 = inlined_call_operand.hbm [shape: bf16[256,128], index: 6, kind: input, shape index: {}]
  %s7 = inlined_call_operand.hbm [shape: bf16[512,128], index: 7, kind: input, shape index: {}]
  %s8 = inlined_call_operand.vmem [shape: f32[4,128], index: 8, kind: input, shape index: {}]
  %s9 = inlined_call_operand.vmem [shape: f32[4,128], index: 9, kind: input, shape index: {}]
  %s10 = inlined_call_operand.<no memory space> [shape: f32[1], index: 10, kind: input, shape index: {}]
  %s11 = inlined_call_operand.vmem [shape: f32[2,1], index: 11, kind: output, shape index: {}]
  %s12 = sld [smem:[#allocation0]]
  $region86: #{tpu_custom_call.1} parent=0
    _
  %s14 = ssub.s32 1, %s12
  %s15 = scalar_select 0, %s14, %s12
  %16 = sst [smem:[#allocation2]] %s10
  $region1: #{tpu_custom_call.1} parent=0
    #allocation3 [shape = 'u8[200704]{0}', space=vmem, size = 0x31000, scoped, tag = 'input window, operand 0, single buffered']
    #allocation4 [shape = 's32[1]{0}', space=sflag, size = 0x4, scoped, tag = 'scoped memory for tpu_custom_call.1']
    #allocation5 [shape = 'u8[102400]{0}', space=vmem, size = 0x19000, scoped, tag = 'input window, operand 1, single buffered']
    #allocation6 [shape = 's32[1]{0}', space=sflag, size = 0x4, scoped, tag = 'scoped memory for tpu_custom_call.1']
    #allocation7 [shape = 'u8[57344]{0}', space=vmem, size = 0xe000, scoped, tag = 'input window, operand 2, single buffered']
    #allocation8 [shape = 'u8[32768]{0}', space=vmem, size = 0x8000, scoped, tag = 'input window, operand 3, single buffered']
    #allocation9 [shape = 's32[1]{0}', space=sflag, size = 0x4, scoped, tag = 'scoped memory for tpu_custom_call.1']
    #allocation10 [shape = 'u8[32768]{0}', space=vmem, size = 0x8000, scoped, tag = 'input window, operand 4, single buffered']
    #allocation11 [shape = 'u8[32768]{0}', space=vmem, size = 0x8000, scoped, tag = 'input window, operand 5, single buffered']
    #allocation12 [shape = 's32[1]{0}', space=sflag, size = 0x4, scoped, tag = 'scoped memory for tpu_custom_call.1']
    #allocation13 [shape = 'u8[65536]{0}', space=vmem, size = 0x10000, scoped, tag = 'input window, operand 6, single buffered']
    #allocation14 [shape = 'u8[131072]{0}', space=vmem, size = 0x20000, scoped, tag = 'input window, operand 7, single buffered']
    #allocation15 [shape = 's32[1]{0}', space=sflag, size = 0x4, scoped, tag = 'scoped memory for tpu_custom_call.1']
    %17 = vsyncpa [#allocation4], 0
    %18 = vsyncpa [#allocation6], 0
    %19 = vsyncpa [#allocation9], 0
    %20 = vsyncpa [#allocation12], 0
    %21 = vsyncpa [#allocation15], 0
    // Predicated region
    $region2: #{tpu_custom_call.1} parent=1 // pred_check
      _
    $region3: #{tpu_custom_call.1} parent=1 // pred_check_branch
      %23 = sbr.rel (0) target = $region5
    $region4: #{tpu_custom_call.1} parent=1 // pred_region
      %s25 = ssub.s32 6272, 6272
      %26 = vsyncadd [#allocation4], %s25
      %s27 = sshll.u32 [#allocation3], 4
      %s28 = int_to_ptr.vmem [resolvable:$true] %s27
      %33 = dma.hbm_to_vmem [thread:$0]  %s0, 6272, %s28, [#allocation4], 64, 64, 4
    $region5: #{tpu_custom_call.1} parent=1 // pred_fallthru
      _
    // Predicated region
    $region6: #{tpu_custom_call.1} parent=1 // pred_check
      _
    $region7: #{tpu_custom_call.1} parent=1 // pred_check_branch
      %35 = sbr.rel (0) target = $region9
    $region8: #{tpu_custom_call.1} parent=1 // pred_region
      %s37 = ssub.s32 3200, 3200
      %38 = vsyncadd [#allocation6], %s37
      %s39 = sshll.u32 [#allocation5], 4
      %s40 = int_to_ptr.vmem [resolvable:$true] %s39
      %45 = dma.hbm_to_vmem [thread:$0]  %s1, 3200, %s40, [#allocation6], 64, 64, 4
    $region9: #{tpu_custom_call.1} parent=1 // pred_fallthru
      _
    // Predicated region
    $region10: #{tpu_custom_call.1} parent=1 // pred_check
      _
    $region11: #{tpu_custom_call.1} parent=1 // pred_check_branch
      %47 = sbr.rel (0) target = $region13
    $region12: #{tpu_custom_call.1} parent=1 // pred_region
      %s49 = ssub.s32 1792, 1792
      %50 = vsyncadd [#allocation6], %s49
      %s51 = sshll.u32 [#allocation7], 4
      %s52 = int_to_ptr.vmem [resolvable:$true] %s51
      %57 = dma.hbm_to_vmem [thread:$0]  %s2, 1792, %s52, [#allocation6], 128, 128, 8
    $region13: #{tpu_custom_call.1} parent=1 // pred_fallthru
      _
    // Predicated region
    $region14: #{tpu_custom_call.1} parent=1 // pred_check
      _
    $region15: #{tpu_custom_call.1} parent=1 // pred_check_branch
      %59 = sbr.rel (0) target = $region17
    $region16: #{tpu_custom_call.1} parent=1 // pred_region
      %s61 = ssub.s32 1024, 1024
      %62 = vsyncadd [#allocation9], %s61
      %s63 = sshll.u32 [#allocation8], 4
      %s64 = int_to_ptr.vmem [resolvable:$true] %s63
      %69 = dma.hbm_to_vmem [thread:$0]  %s3, 1024, %s64, [#allocation9], 256, 256, 16
    $region17: #{tpu_custom_call.1} parent=1 // pred_fallthru
      _
    // Predicated region
    $region18: #{tpu_custom_call.1} parent=1 // pred_check
      _
    $region19: #{tpu_custom_call.1} parent=1 // pred_check_branch
      %71 = sbr.rel (0) target = $region21
    $region20: #{tpu_custom_call.1} parent=1 // pred_region
      %s73 = ssub.s32 1024, 1024
      %74 = vsyncadd [#allocation9], %s73
      %s75 = sshll.u32 [#allocation10], 4
      %s76 = int_to_ptr.vmem [resolvable:$true] %s75
      %81 = dma.hbm_to_vmem [thread:$0]  %s4, 1024, %s76, [#allocation9], 64, 64, 4
    $region21: #{tpu_custom_call.1} parent=1 // pred_fallthru
      _
    // Predicated region
    $region22: #{tpu_custom_call.1} parent=1 // pred_check
      _
    $region23: #{tpu_custom_call.1} parent=1 // pred_check_branch
      %83 = sbr.rel (0) target = $region25
    $region24: #{tpu_custom_call.1} parent=1 // pred_region
      %s85 = ssub.s32 1024, 1024
      %86 = vsyncadd [#allocation12], %s85
      %s87 = sshll.u32 [#allocation11], 4
      %s88 = int_to_ptr.vmem [resolvable:$true] %s87
      %93 = dma.hbm_to_vmem [thread:$0]  %s5, 1024, %s88, [#allocation12], 64, 64, 4
    $region25: #{tpu_custom_call.1} parent=1 // pred_fallthru
      _
    // Predicated region
    $region26: #{tpu_custom_call.1} parent=1 // pred_check
      _
    $region27: #{tpu_custom_call.1} parent=1 // pred_check_branch
      %95 = sbr.rel (0) target = $region29
    $region28: #{tpu_custom_call.1} parent=1 // pred_region
      %s97 = ssub.s32 2048, 2048
      %98 = vsyncadd [#allocation12], %s97
      %s99 = sshll.u32 [#allocation13], 4
      %s100 = int_to_ptr.vmem [resolvable:$true] %s99
      %105 = dma.hbm_to_vmem [thread:$0]  %s6, 2048, %s100, [#allocation12], 64, 64, 4
    $region29: #{tpu_custom_call.1} parent=1 // pred_fallthru
      _
    // Predicated region
    $region30: #{tpu_custom_call.1} parent=1 // pred_check
      _
    $region31: #{tpu_custom_call.1} parent=1 // pred_check_branch
      %107 = sbr.rel (0) target = $region33
    $region32: #{tpu_custom_call.1} parent=1 // pred_region
      %s109 = ssub.s32 4096, 4096
      %110 = vsyncadd [#allocation15], %s109
      %s111 = sshll.u32 [#allocation14], 4
      %s112 = int_to_ptr.vmem [resolvable:$true] %s111
      %117 = dma.hbm_to_vmem [thread:$0]  %s7, 4096, %s112, [#allocation15], 64, 64, 4
    $region33: #{tpu_custom_call.1} parent=1 // pred_fallthru
      _
    // Predicated region
    $region34: #{tpu_custom_call.1} parent=1 // pred_check
      _
    $region35: #{tpu_custom_call.1} parent=1 // pred_check_branch
      %119 = sbr.rel (0) target = $region37
    $region36: #{tpu_custom_call.1} parent=1 // pred_region
      _
    $region37: #{tpu_custom_call.1} parent=1 // pred_fallthru
      _
    // Predicated region
    $region38: #{tpu_custom_call.1} parent=1 // pred_check
      _
    $region39: #{tpu_custom_call.1} parent=1 // pred_check_branch
      %121 = sbr.rel (0) target = $region41
    $region40: #{tpu_custom_call.1} parent=1 // pred_region
      _
    $region41: #{tpu_custom_call.1} parent=1 // pred_fallthru
      _
    // Predicated region
    $region42: #{tpu_custom_call.1} parent=1 // pred_check
      _
    $region43: #{tpu_custom_call.1} parent=1 // pred_check_branch
      %123 = sbr.rel (0) target = $region45
    $region44: #{tpu_custom_call.1} parent=1 // pred_region
      _
    $region45: #{tpu_custom_call.1} parent=1 // pred_fallthru
      _
    // Predicated region
    $region46: #{tpu_custom_call.1} parent=1 // pred_check
      _
    $region47: #{tpu_custom_call.1} parent=1 // pred_check_branch
      %125 = sbr.rel (0) target = $region49
    $region48: #{tpu_custom_call.1} parent=1 // pred_region
      %126 = dma.done [#allocation4], 6272
    $region49: #{tpu_custom_call.1} parent=1 // pred_fallthru
      _
    // Predicated region
    $region50: #{tpu_custom_call.1} parent=1 // pred_check
      _
    $region51: #{tpu_custom_call.1} parent=1 // pred_check_branch
      %128 = sbr.rel (0) target = $region53
    $region52: #{tpu_custom_call.1} parent=1 // pred_region
      %129 = dma.done [#allocation6], 3200
    $region53: #{tpu_custom_call.1} parent=1 // pred_fallthru
      _
    // Predicated region
    $region54: #{tpu_custom_call.1} parent=1 // pred_check
      _
    $region55: #{tpu_custom_call.1} parent=1 // pred_check_branch
      %131 = sbr.rel (0) target = $region57
    $region56: #{tpu_custom_call.1} parent=1 // pred_region
      %132 = dma.done [#allocation6], 1792
    $region57: #{tpu_custom_call.1} parent=1 // pred_fallthru
      _
    // Predicated region
    $region58: #{tpu_custom_call.1} parent=1 // pred_check
      _
    $region59: #{tpu_custom_call.1} parent=1 // pred_check_branch
      %134 = sbr.rel (0) target = $region61
    $region60: #{tpu_custom_call.1} parent=1 // pred_region
      %135 = dma.done [#allocation9], 1024
    $region61: #{tpu_custom_call.1} parent=1 // pred_fallthru
      _
    // Predicated region
    $region62: #{tpu_custom_call.1} parent=1 // pred_check
      _
    $region63: #{tpu_custom_call.1} parent=1 // pred_check_branch
      %137 = sbr.rel (0) target = $region65
    $region64: #{tpu_custom_call.1} parent=1 // pred_region
      %138 = dma.done [#allocation9], 1024
    $region65: #{tpu_custom_call.1} parent=1 // pred_fallthru
      _
    // Predicated region
    $region66: #{tpu_custom_call.1} parent=1 // pred_check
      _
    $region67: #{tpu_custom_call.1} parent=1 // pred_check_branch
      %140 = sbr.rel (0) target = $region69
    $region68: #{tpu_custom_call.1} parent=1 // pred_region
      %141 = dma.done [#allocation12], 1024
    $region69: #{tpu_custom_call.1} parent=1 // pred_fallthru
      _
    // Predicated region
    $region70: #{tpu_custom_call.1} parent=1 // pred_check
      _
    $region71: #{tpu_custom_call.1} parent=1 // pred_check_branch
      %143 = sbr.rel (0) target = $region73
    $region72: #{tpu_custom_call.1} parent=1 // pred_region
      %144 = dma.done [#allocation12], 2048
    $region73: #{tpu_custom_call.1} parent=1 // pred_fallthru
      _
    // Predicated region
    $region74: #{tpu_custom_call.1} parent=1 // pred_check
      _
    $region75: #{tpu_custom_call.1} parent=1 // pred_check_branch
      %146 = sbr.rel (0) target = $region77
    $region76: #{tpu_custom_call.1} parent=1 // pred_region
      %147 = dma.done [#allocation15], 4096
    $region77: #{tpu_custom_call.1} parent=1 // pred_fallthru
      _
    %v149 = vld [vmem:[#allocation3] sm:$0xf]
    %v150 = vld [vmem:[#allocation3 + $0x4] sm:$0xf]
    %v151 = vld [vmem:[#allocation3 + $0x8] sm:$0xf]
    %v152 = vld [vmem:[#allocation3 + $0xc] sm:$0xf]
    %v153 = vld [vmem:[#allocation3 + $0x10] sm:$0xf]
    %v154 = vld [vmem:[#allocation3 + $0x14] sm:$0xf]
    %v155 = vld [vmem:[#allocation3 + $0x18] sm:$0xf]
    %v156 = vld [vmem:[#allocation3 + $0x1c] sm:$0xf]
    %v157 = vld [vmem:[#allocation3 + $0x20] sm:$0xf]
    %v158 = vld [vmem:[#allocation3 + $0x24] sm:$0xf]
    %v159 = vld [vmem:[#allocation3 + $0x28] sm:$0xf]
    %v160 = vld [vmem:[#allocation3 + $0x2c] sm:$0xf]
    %v161 = vld [vmem:[#allocation3 + $0x30] sm:$0xf]
    %v162 = vld [vmem:[#allocation3 + $0x34] sm:$0xf]
    %v163 = vld [vmem:[#allocation3 + $0x38] sm:$0xf]
    %v164 = vld [vmem:[#allocation3 + $0x3c] sm:$0xf]
    %v165 = vld [vmem:[#allocation3 + $0x40] sm:$0xf]
    %v166 = vld [vmem:[#allocation3 + $0x44] sm:$0xf]
    %v167 = vld [vmem:[#allocation3 + $0x48] sm:$0xf]
    %v168 = vld [vmem:[#allocation3 + $0x4c] sm:$0xf]
    %v169 = vld [vmem:[#allocation3 + $0x50] sm:$0xf]
    %v170 = vld [vmem:[#allocation3 + $0x54] sm:$0xf]
    %v171 = vld [vmem:[#allocation3 + $0x58] sm:$0xf]
    %v172 = vld [vmem:[#allocation3 + $0x5c] sm:$0xf]
    %v173 = vld [vmem:[#allocation3 + $0x60] sm:$0xf]
    %v174 = vld [vmem:[#allocation3 + $0x64] sm:$0xf]
    %v175 = vld [vmem:[#allocation3 + $0x68] sm:$0xf]
    %v176 = vld [vmem:[#allocation3 + $0x6c] sm:$0xf]
    %v177 = vld [vmem:[#allocation3 + $0x70] sm:$0xf]
    %v178 = vld [vmem:[#allocation3 + $0x74] sm:$0xf]
    %v179 = vld [vmem:[#allocation3 + $0x78] sm:$0xf]
    %v180 = vld [vmem:[#allocation3 + $0x7c] sm:$0xf]
    %v181 = vld [vmem:[#allocation3 + $0x80] sm:$0xf]
    %v182 = vld [vmem:[#allocation3 + $0x84] sm:$0xf]
    %v183 = vld [vmem:[#allocation3 + $0x88] sm:$0xf]
    %v184 = vld [vmem:[#allocation3 + $0x8c] sm:$0xf]
    %v185 = vld [vmem:[#allocation3 + $0x90] sm:$0xf]
    %v186 = vld [vmem:[#allocation3 + $0x94] sm:$0xf]
    %v187 = vld [vmem:[#allocation3 + $0x98] sm:$0xf]
    %v188 = vld [vmem:[#allocation3 + $0x9c] sm:$0xf]
    %v189 = vld [vmem:[#allocation3 + $0xa0] sm:$0xf]
    %v190 = vld [vmem:[#allocation3 + $0xa4] sm:$0xf]
    %v191 = vld [vmem:[#allocation3 + $0xa8] sm:$0xf]
    %v192 = vld [vmem:[#allocation3 + $0xac] sm:$0xf]
    %v193 = vld [vmem:[#allocation3 + $0xb0] sm:$0xf]
    %v194 = vld [vmem:[#allocation3 + $0xb4] sm:$0xf]
    %v195 = vld [vmem:[#allocation3 + $0xb8] sm:$0xf]
    %v196 = vld [vmem:[#allocation3 + $0xbc] sm:$0xf]
    %v197 = vld [vmem:[#allocation3 + $0xc0] sm:$0xf]
    %v198 = vld [vmem:[#allocation3 + $0xc4] sm:$0xf]
    %v199 = vld [vmem:[#allocation3 + $0xc8] sm:$0xf]
    %v200 = vld [vmem:[#allocation3 + $0xcc] sm:$0xf]
    %v201 = vld [vmem:[#allocation3 + $0xd0] sm:$0xf]
    %v202 = vld [vmem:[#allocation3 + $0xd4] sm:$0xf]
    %v203 = vld [vmem:[#allocation3 + $0xd8] sm:$0xf]
    %v204 = vld [vmem:[#allocation3 + $0xdc] sm:$0xf]
    %v205 = vld [vmem:[#allocation3 + $0xe0] sm:$0xf]
    %v206 = vld [vmem:[#allocation3 + $0xe4] sm:$0xf]
    %v207 = vld [vmem:[#allocation3 + $0xe8] sm:$0xf]
    %v208 = vld [vmem:[#allocation3 + $0xec] sm:$0xf]
    %v209 = vld [vmem:[#allocation3 + $0xf0] sm:$0xf]
    %v210 = vld [vmem:[#allocation3 + $0xf4] sm:$0xf]
    %v211 = vld [vmem:[#allocation3 + $0xf8] sm:$0xf]
    %v212 = vld [vmem:[#allocation3 + $0xfc] sm:$0xf]
    %v213 = vld [vmem:[#allocation3 + $0x100] sm:$0xf]
    %v214 = vld [vmem:[#allocation3 + $0x104] sm:$0xf]
    %v215 = vld [vmem:[#allocation3 + $0x108] sm:$0xf]
    %v216 = vld [vmem:[#allocation3 + $0x10c] sm:$0xf]
    %v217 = vld [vmem:[#allocation3 + $0x110] sm:$0xf]
    %v218 = vld [vmem:[#allocation3 + $0x114] sm:$0xf]
    %v219 = vld [vmem:[#allocation3 + $0x118] sm:$0xf]
    %v220 = vld [vmem:[#allocation3 + $0x11c] sm:$0xf]
    %v221 = vld [vmem:[#allocation3 + $0x120] sm:$0xf]
    %v222 = vld [vmem:[#allocation3 + $0x124] sm:$0xf]
    %v223 = vld [vmem:[#allocation3 + $0x128] sm:$0xf]
    %v224 = vld [vmem:[#allocation3 + $0x12c] sm:$0xf]
    %v225 = vld [vmem:[#allocation3 + $0x130] sm:$0xf]
    %v226 = vld [vmem:[#allocation3 + $0x134] sm:$0xf]
    %v227 = vld [vmem:[#allocation3 + $0x138] sm:$0xf]
    %v228 = vld [vmem:[#allocation3 + $0x13c] sm:$0xf]
    %v229 = vld [vmem:[#allocation3 + $0x140] sm:$0xf]
    %v230 = vld [vmem:[#allocation3 + $0x144] sm:$0xf]
    %v231 = vld [vmem:[#allocation3 + $0x148] sm:$0xf]
    %v232 = vld [vmem:[#allocation3 + $0x14c] sm:$0xf]
    %v233 = vld [vmem:[#allocation3 + $0x150] sm:$0xf]
    %v234 = vld [vmem:[#allocation3 + $0x154] sm:$0xf]
    %v235 = vld [vmem:[#allocation3 + $0x158] sm:$0xf]
    %v236 = vld [vmem:[#allocation3 + $0x15c] sm:$0xf]
    %v237 = vld [vmem:[#allocation3 + $0x160] sm:$0xf]
    %v238 = vld [vmem:[#allocation3 + $0x164] sm:$0xf]
    %v239 = vld [vmem:[#allocation3 + $0x168] sm:$0xf]
    %v240 = vld [vmem:[#allocation3 + $0x16c] sm:$0xf]
    %v241 = vld [vmem:[#allocation3 + $0x170] sm:$0xf]
    %v242 = vld [vmem:[#allocation3 + $0x174] sm:$0xf]
    %v243 = vld [vmem:[#allocation3 + $0x178] sm:$0xf]
    %v244 = vld [vmem:[#allocation3 + $0x17c] sm:$0xf]
    %v245 = vld [vmem:[#allocation3 + $0x180] sm:$0xf]
    %v246 = vld [vmem:[#allocation3 + $0x184] sm:$0xf]
    %v247 = vunpack.c.l.bf16 %v149
    %v248 = vunpack.c.l.bf16 %v150
    %v249 = vunpack.c.l.bf16 %v151
    %v250 = vunpack.c.l.bf16 %v152
    %v251 = vunpack.c.l.bf16 %v153
    %v252 = vunpack.c.l.bf16 %v154
    %v253 = vunpack.c.l.bf16 %v155
    %v254 = vunpack.c.l.bf16 %v156
    %v255 = vunpack.c.l.bf16 %v157
    %v256 = vunpack.c.l.bf16 %v158
    %v257 = vunpack.c.l.bf16 %v159
    %v258 = vunpack.c.l.bf16 %v160
    %v259 = vunpack.c.l.bf16 %v161
    %v260 = vunpack.c.l.bf16 %v162
    %v261 = vunpack.c.l.bf16 %v163
    %v262 = vunpack.c.l.bf16 %v164
    %v263 = vunpack.c.l.bf16 %v165
    %v264 = vunpack.c.l.bf16 %v166
    %v265 = vunpack.c.l.bf16 %v167
    %v266 = vunpack.c.l.bf16 %v168
    %v267 = vunpack.c.l.bf16 %v169
    %v268 = vunpack.c.l.bf16 %v170
    %v269 = vunpack.c.l.bf16 %v171
    %v270 = vunpack.c.l.bf16 %v172
    %v271 = vunpack.c.l.bf16 %v173
    %v272 = vunpack.c.l.bf16 %v174
    %v273 = vunpack.c.l.bf16 %v175
    %v274 = vunpack.c.l.bf16 %v176
    %v275 = vunpack.c.l.bf16 %v177
    %v276 = vunpack.c.l.bf16 %v178
    %v277 = vunpack.c.l.bf16 %v179
    %v278 = vunpack.c.l.bf16 %v180
    %v279 = vunpack.c.l.bf16 %v181
    %v280 = vunpack.c.l.bf16 %v182
    %v281 = vunpack.c.l.bf16 %v183
    %v282 = vunpack.c.l.bf16 %v184
    %v283 = vunpack.c.l.bf16 %v185
    %v284 = vunpack.c.l.bf16 %v186
    %v285 = vunpack.c.l.bf16 %v187
    %v286 = vunpack.c.l.bf16 %v188
    %v287 = vunpack.c.l.bf16 %v189
    %v288 = vunpack.c.l.bf16 %v190
    %v289 = vunpack.c.l.bf16 %v191
    %v290 = vunpack.c.l.bf16 %v192
    %v291 = vunpack.c.l.bf16 %v193
    %v292 = vunpack.c.l.bf16 %v194
    %v293 = vunpack.c.l.bf16 %v195
    %v294 = vunpack.c.l.bf16 %v196
    %v295 = vunpack.c.l.bf16 %v197
    %v296 = vunpack.c.l.bf16 %v198
    %v297 = vunpack.c.l.bf16 %v199
    %v298 = vunpack.c.l.bf16 %v200
    %v299 = vunpack.c.l.bf16 %v201
    %v300 = vunpack.c.l.bf16 %v202
    %v301 = vunpack.c.l.bf16 %v203
    %v302 = vunpack.c.l.bf16 %v204
    %v303 = vunpack.c.l.bf16 %v205
    %v304 = vunpack.c.l.bf16 %v206
    %v305 = vunpack.c.l.bf16 %v207
    %v306 = vunpack.c.l.bf16 %v208
    %v307 = vunpack.c.l.bf16 %v209
    %v308 = vunpack.c.l.bf16 %v210
    %v309 = vunpack.c.l.bf16 %v211
    %v310 = vunpack.c.l.bf16 %v212
    %v311 = vunpack.c.l.bf16 %v213
    %v312 = vunpack.c.l.bf16 %v214
    %v313 = vunpack.c.l.bf16 %v215
    %v314 = vunpack.c.l.bf16 %v216
    %v315 = vunpack.c.l.bf16 %v217
    %v316 = vunpack.c.l.bf16 %v218
    %v317 = vunpack.c.l.bf16 %v219
    %v318 = vunpack.c.l.bf16 %v220
    %v319 = vunpack.c.l.bf16 %v221
    %v320 = vunpack.c.l.bf16 %v222
    %v321 = vunpack.c.l.bf16 %v223
    %v322 = vunpack.c.l.bf16 %v224
    %v323 = vunpack.c.l.bf16 %v225
    %v324 = vunpack.c.l.bf16 %v226
    %v325 = vunpack.c.l.bf16 %v227
    %v326 = vunpack.c.l.bf16 %v228
    %v327 = vunpack.c.l.bf16 %v229
    %v328 = vunpack.c.l.bf16 %v230
    %v329 = vunpack.c.l.bf16 %v231
    %v330 = vunpack.c.l.bf16 %v232
    %v331 = vunpack.c.l.bf16 %v233
    %v332 = vunpack.c.l.bf16 %v234
    %v333 = vunpack.c.l.bf16 %v235
    %v334 = vunpack.c.l.bf16 %v236
    %v335 = vunpack.c.l.bf16 %v237
    %v336 = vunpack.c.l.bf16 %v238
    %v337 = vunpack.c.l.bf16 %v239
    %v338 = vunpack.c.l.bf16 %v240
    %v339 = vunpack.c.l.bf16 %v241
    %v340 = vunpack.c.l.bf16 %v242
    %v341 = vunpack.c.l.bf16 %v243
    %v342 = vunpack.c.l.bf16 %v244
    %v343 = vunpack.c.l.bf16 %v245
    %v344 = vunpack.c.l.bf16 %v246
    %v345 = vadd.f32 %v247, %v248
    %v346 = vadd.f32 %v345, %v249
    %v347 = vadd.f32 %v346, %v250
    %v348 = vadd.f32 %v347, %v251
    %v349 = vadd.f32 %v348, %v252
    %v350 = vadd.f32 %v349, %v253
    %v351 = vadd.f32 %v350, %v254
    %v352 = vadd.f32 %v351, %v255
    %v353 = vadd.f32 %v352, %v256
    %v354 = vadd.f32 %v353, %v257
    %v355 = vadd.f32 %v354, %v258
    %v356 = vadd.f32 %v355, %v259
    %v357 = vadd.f32 %v356, %v260
    %v358 = vadd.f32 %v357, %v261
    %v359 = vadd.f32 %v358, %v262
    %v360 = vadd.f32 %v359, %v263
    %v361 = vadd.f32 %v360, %v264
    %v362 = vadd.f32 %v361, %v265
    %v363 = vadd.f32 %v362, %v266
    %v364 = vadd.f32 %v363, %v267
    %v365 = vadd.f32 %v364, %v268
    %v366 = vadd.f32 %v365, %v269
    %v367 = vadd.f32 %v366, %v270
    %v368 = vadd.f32 %v367, %v271
    %v369 = vadd.f32 %v368, %v272
    %v370 = vadd.f32 %v369, %v273
    %v371 = vadd.f32 %v370, %v274
    %v372 = vadd.f32 %v371, %v275
    %v373 = vadd.f32 %v372, %v276
    %v374 = vadd.f32 %v373, %v277
    %v375 = vadd.f32 %v374, %v278
    %v376 = vadd.f32 %v375, %v279
    %v377 = vadd.f32 %v376, %v280
    %v378 = vadd.f32 %v377, %v281
    %v379 = vadd.f32 %v378, %v282
    %v380 = vadd.f32 %v379, %v283
    %v381 = vadd.f32 %v380, %v284
    %v382 = vadd.f32 %v381, %v285
    %v383 = vadd.f32 %v382, %v286
    %v384 = vadd.f32 %v383, %v287
    %v385 = vadd.f32 %v384, %v288
    %v386 = vadd.f32 %v385, %v289
    %v387 = vadd.f32 %v386, %v290
    %v388 = vadd.f32 %v387, %v291
    %v389 = vadd.f32 %v388, %v292
    %v390 = vadd.f32 %v389, %v293
    %v391 = vadd.f32 %v390, %v294
    %v392 = vadd.f32 %v391, %v295
    %v393 = vrot.slane %v392, 4
    %v394 = vadd.f32 %v392, %v393
    %v395 = vrot.slane %v394, 2
    %v396 = vadd.f32 %v394, %v395
    %v397 = vrot.slane %v396, 1
    %v398 = vadd.f32 %v396, %v397
    %v399 = vadd.f32 %v296, %v297
    %v400 = vadd.f32 %v399, %v298
    %v401 = vadd.f32 %v400, %v299
    %v402 = vadd.f32 %v401, %v300
    %v403 = vadd.f32 %v402, %v301
    %v404 = vadd.f32 %v403, %v302
    %v405 = vadd.f32 %v404, %v303
    %v406 = vadd.f32 %v405, %v304
    %v407 = vadd.f32 %v406, %v305
    %v408 = vadd.f32 %v407, %v306
    %v409 = vadd.f32 %v408, %v307
    %v410 = vadd.f32 %v409, %v308
    %v411 = vadd.f32 %v410, %v309
    %v412 = vadd.f32 %v411, %v310
    %v413 = vadd.f32 %v412, %v311
    %v414 = vadd.f32 %v413, %v312
    %v415 = vadd.f32 %v414, %v313
    %v416 = vadd.f32 %v415, %v314
    %v417 = vadd.f32 %v416, %v315
    %v418 = vadd.f32 %v417, %v316
    %v419 = vadd.f32 %v418, %v317
    %v420 = vadd.f32 %v419, %v318
    %v421 = vadd.f32 %v420, %v319
    %v422 = vadd.f32 %v421, %v320
    %v423 = vadd.f32 %v422, %v321
    %v424 = vadd.f32 %v423, %v322
    %v425 = vadd.f32 %v424, %v323
    %v426 = vadd.f32 %v425, %v324
    %v427 = vadd.f32 %v426, %v325
    %v428 = vadd.f32 %v427, %v326
    %v429 = vadd.f32 %v428, %v327
    %v430 = vadd.f32 %v429, %v328
    %v431 = vadd.f32 %v430, %v329
    %v432 = vadd.f32 %v431, %v330
    %v433 = vadd.f32 %v432, %v331
    %v434 = vadd.f32 %v433, %v332
    %v435 = vadd.f32 %v434, %v333
    %v436 = vadd.f32 %v435, %v334
    %v437 = vadd.f32 %v436, %v335
    %v438 = vadd.f32 %v437, %v336
    %v439 = vadd.f32 %v438, %v337
    %v440 = vadd.f32 %v439, %v338
    %v441 = vadd.f32 %v440, %v339
    %v442 = vadd.f32 %v441, %v340
    %v443 = vadd.f32 %v442, %v341
    %v444 = vadd.f32 %v443, %v342
    %v445 = vadd.f32 %v444, %v343
    %v446 = vadd.f32 %v445, %v344
    %v447 = vrot.slane %v446, 4
    %v448 = vadd.f32 %v446, %v447
    %v449 = vrot.slane %v448, 2
    %v450 = vadd.f32 %v448, %v449
    %v451 = vrot.slane %v450, 1
    %v452 = vadd.f32 %v450, %v451
    %v453 = vpack.c.bf16 %v398, %v398
    %v454 = vpack.c.bf16 %v452, %v452
    %v455 = vld [vmem:[#allocation10] sm:$0xf]
    %v456 = vld [vmem:[#allocation10 + $0x4] sm:$0xf]
    %v457 = vld [vmem:[#allocation10 + $0x8] sm:$0xf]
    %v458 = vld [vmem:[#allocation10 + $0xc] sm:$0xf]
    %v459 = vld [vmem:[#allocation10 + $0x10] sm:$0xf]
    %v460 = vld [vmem:[#allocation10 + $0x14] sm:$0xf]
    %v461 = vld [vmem:[#allocation10 + $0x18] sm:$0xf]
    %v462 = vld [vmem:[#allocation10 + $0x1c] sm:$0xf]
    %v463 = vld [vmem:[#allocation10 + $0x20] sm:$0xf]
    %v464 = vld [vmem:[#allocation10 + $0x24] sm:$0xf]
    %v465 = vld [vmem:[#allocation10 + $0x28] sm:$0xf]
    %v466 = vld [vmem:[#allocation10 + $0x2c] sm:$0xf]
    %v467 = vld [vmem:[#allocation10 + $0x30] sm:$0xf]
    %v468 = vld [vmem:[#allocation10 + $0x34] sm:$0xf]
    %v469 = vld [vmem:[#allocation10 + $0x38] sm:$0xf]
    %v470 = vld [vmem:[#allocation10 + $0x3c] sm:$0xf]
    %v471 = vld [vmem:[%s8] sm:$0x1]
    %v472 = vlaneseq
    %v473 = vshrl.u32 %v472, 7
    %v474 = vsub.s32 0, %v473
    %v475 = vrot.slane %v471, %v474
    %v478 = vunpack.c.l.b16 %v453
    %v479 = vunpack.c.l.b16 %v454
    %vm480 = vcmask 1041409
    %v481 = vsel %vm480, %v479, %v478
    %v482 = vpack.c.b16 %v481, %v481
    %v500 = vunpack.c.l.b16 %v455
    %v501 = vunpack.c.l.b16 %v456
    %v502 = vunpack.c.l.b16 %v457
    %v503 = vunpack.c.l.b16 %v458
    %v504 = vunpack.c.l.b16 %v459
    %v505 = vunpack.c.l.b16 %v460
    %v506 = vunpack.c.l.b16 %v461
    %v507 = vunpack.c.l.b16 %v462
    %v508 = vunpack.c.l.b16 %v463
    %v509 = vunpack.c.l.b16 %v464
    %v510 = vunpack.c.l.b16 %v465
    %v511 = vunpack.c.l.b16 %v466
    %v512 = vunpack.c.l.b16 %v467
    %v513 = vunpack.c.l.b16 %v468
    %v514 = vunpack.c.l.b16 %v469
    %v515 = vunpack.c.l.b16 %v470
    %v516 = vpack.c.b16 %v501, %v500
    %v517 = vpack.c.b16 %v503, %v502
    %v518 = vpack.c.b16 %v505, %v504
    %v519 = vpack.c.b16 %v507, %v506
    %v520 = vpack.c.b16 %v509, %v508
    %v521 = vpack.c.b16 %v511, %v510
    %v522 = vpack.c.b16 %v513, %v512
    %v523 = vpack.c.b16 %v515, %v514
    %532 = vmatprep.subr.bf16.mxu0 0
    %533 = vmatpush1.bf16.msra.mxu0 %v523
    %534 = vmatprep.subr.bf16.mxu0 0
    %535 = vmatpush1.bf16.msra.mxu0 %v522
    %536 = vmatprep.subr.bf16.mxu0 0
    %537 = vmatpush1.bf16.msra.mxu0 %v521
    %538 = vmatprep.subr.bf16.mxu0 0
    %539 = vmatpush1.bf16.msra.mxu0 %v520
    %540 = vmatprep.subr.bf16.mxu0 0
    %541 = vmatpush1.bf16.msra.mxu0 %v519
    %542 = vmatprep.subr.bf16.mxu0 0
    %543 = vmatpush1.bf16.msra.mxu0 %v518
    %544 = vmatprep.subr.bf16.mxu0 0
    %545 = vmatpush1.bf16.msra.mxu0 %v517
    %546 = vmatprep.subr.bf16.mxu0 0
    %547 = vmatpush1.bf16.msra.mxu0 %v516
    %548 = vmatprep.subr.bf16.mxu0 0
    %549 = vmatpush2.bf16.msra.mxu0 0
    %550 = vmatprep.subr.bf16.mxu0 0
    %551 = vmatpush2.bf16.msra.mxu0 0
    %552 = vmatprep.subr.bf16.mxu0 0
    %553 = vmatpush2.bf16.msra.mxu0 0
    %554 = vmatprep.subr.bf16.mxu0 0
    %555 = vmatpush2.bf16.msra.mxu0 0
    %556 = vmatprep.subr.bf16.mxu0 0
    %557 = vmatpush2.bf16.msra.mxu0 0
    %558 = vmatprep.subr.bf16.mxu0 0
    %559 = vmatpush2.bf16.msra.mxu0 0
    %560 = vmatprep.subr.bf16.mxu0 0
    %561 = vmatpush2.bf16.msra.mxu0 0
    %562 = vmatprep.subr.bf16.mxu0 0
    %563 = vmatpush2.bf16.msra.mxu0 0
    %564 = vmatprep.mubr.bf16.mxu0 0
    %565 = vmatmul.mubr.bf16.gmra.mxu0 %v482
    %v566 = vpop.f32.mrf.mxu0
    %v567 = vadd.f32 %v475, %v566
    %v568 = vpop.f32.mrf.mxu0
    %v569 = vpop.f32.mrf.mxu0
    %v570 = vpop.f32.mrf.mxu0
    %571 = vdwg.mxu0
    %v572 = vmax.f32 %v567, 0.0
    %v573 = vld [vmem:[%s9] sm:$0x1]
    %v574 = vlaneseq
    %v575 = vshrl.u32 %v574, 7
    %v576 = vsub.s32 0, %v575
    %v577 = vrot.slane %v573, %v576
    %v578 = vmul.f32 %v572, %v577
    %vm579 = vcmask 1041408
    %v580 = vsel %vm579, %v578, 0.0
    %581 = vadd.xlane.f32.xlu0 %v580
    %v582 = vpop.xlane.xlu0 %581
    %v583 = vld [vmem:[#allocation5] sm:$0xf]
    %v584 = vld [vmem:[#allocation5 + $0x4] sm:$0xf]
    %v585 = vld [vmem:[#allocation5 + $0x8] sm:$0xf]
    %v586 = vld [vmem:[#allocation5 + $0xc] sm:$0xf]
    %v587 = vld [vmem:[#allocation5 + $0x10] sm:$0xf]
    %v588 = vld [vmem:[#allocation5 + $0x14] sm:$0xf]
    %v589 = vld [vmem:[#allocation5 + $0x18] sm:$0xf]
    %v590 = vld [vmem:[#allocation5 + $0x1c] sm:$0xf]
    %v591 = vld [vmem:[#allocation5 + $0x20] sm:$0xf]
    %v592 = vld [vmem:[#allocation5 + $0x24] sm:$0xf]
    %v593 = vld [vmem:[#allocation5 + $0x28] sm:$0xf]
    %v594 = vld [vmem:[#allocation5 + $0x2c] sm:$0xf]
    %v595 = vld [vmem:[#allocation5 + $0x30] sm:$0xf]
    %v596 = vld [vmem:[#allocation5 + $0x34] sm:$0xf]
    %v597 = vld [vmem:[#allocation5 + $0x38] sm:$0xf]
    %v598 = vld [vmem:[#allocation5 + $0x3c] sm:$0xf]
    %v599 = vld [vmem:[#allocation5 + $0x40] sm:$0xf]
    %v600 = vld [vmem:[#allocation5 + $0x44] sm:$0xf]
    %v601 = vld [vmem:[#allocation5 + $0x48] sm:$0xf]
    %v602 = vld [vmem:[#allocation5 + $0x4c] sm:$0xf]
    %v603 = vld [vmem:[#allocation5 + $0x50] sm:$0xf]
    %v604 = vld [vmem:[#allocation5 + $0x54] sm:$0xf]
    %v605 = vld [vmem:[#allocation5 + $0x58] sm:$0xf]
    %v606 = vld [vmem:[#allocation5 + $0x5c] sm:$0xf]
    %v607 = vld [vmem:[#allocation5 + $0x60] sm:$0xf]
    %v608 = vld [vmem:[#allocation5 + $0x64] sm:$0xf]
    %v609 = vld [vmem:[#allocation5 + $0x68] sm:$0xf]
    %v610 = vld [vmem:[#allocation5 + $0x6c] sm:$0xf]
    %v611 = vld [vmem:[#allocation5 + $0x70] sm:$0xf]
    %v612 = vld [vmem:[#allocation5 + $0x74] sm:$0xf]
    %v613 = vld [vmem:[#allocation5 + $0x78] sm:$0xf]
    %v614 = vld [vmem:[#allocation5 + $0x7c] sm:$0xf]
    %v615 = vld [vmem:[#allocation5 + $0x80] sm:$0xf]
    %v616 = vld [vmem:[#allocation5 + $0x84] sm:$0xf]
    %v617 = vld [vmem:[#allocation5 + $0x88] sm:$0xf]
    %v618 = vld [vmem:[#allocation5 + $0x8c] sm:$0xf]
    %v619 = vld [vmem:[#allocation5 + $0x90] sm:$0xf]
    %v620 = vld [vmem:[#allocation5 + $0x94] sm:$0xf]
    %v621 = vld [vmem:[#allocation5 + $0x98] sm:$0xf]
    %v622 = vld [vmem:[#allocation5 + $0x9c] sm:$0xf]
    %v623 = vld [vmem:[#allocation5 + $0xa0] sm:$0xf]
    %v624 = vld [vmem:[#allocation5 + $0xa4] sm:$0xf]
    %v625 = vld [vmem:[#allocation5 + $0xa8] sm:$0xf]
    %v626 = vld [vmem:[#allocation5 + $0xac] sm:$0xf]
    %v627 = vld [vmem:[#allocation5 + $0xb0] sm:$0xf]
    %v628 = vld [vmem:[#allocation5 + $0xb4] sm:$0xf]
    %v629 = vld [vmem:[#allocation5 + $0xb8] sm:$0xf]
    %v630 = vld [vmem:[#allocation5 + $0xbc] sm:$0xf]
    %v631 = vld [vmem:[#allocation5 + $0xc0] sm:$0xf]
    %v632 = vld [vmem:[#allocation5 + $0xc4] sm:$0xf]
    %v633 = vunpack.c.l.bf16 %v583
    %v634 = vunpack.c.l.bf16 %v584
    %v635 = vunpack.c.l.bf16 %v585
    %v636 = vunpack.c.l.bf16 %v586
    %v637 = vunpack.c.l.bf16 %v587
    %v638 = vunpack.c.l.bf16 %v588
    %v639 = vunpack.c.l.bf16 %v589
    %v640 = vunpack.c.l.bf16 %v590
    %v641 = vunpack.c.l.bf16 %v591
    %v642 = vunpack.c.l.bf16 %v592
    %v643 = vunpack.c.l.bf16 %v593
    %v644 = vunpack.c.l.bf16 %v594
    %v645 = vunpack.c.l.bf16 %v595
    %v646 = vunpack.c.l.bf16 %v596
    %v647 = vunpack.c.l.bf16 %v597
    %v648 = vunpack.c.l.bf16 %v598
    %v649 = vunpack.c.l.bf16 %v599
    %v650 = vunpack.c.l.bf16 %v600
    %v651 = vunpack.c.l.bf16 %v601
    %v652 = vunpack.c.l.bf16 %v602
    %v653 = vunpack.c.l.bf16 %v603
    %v654 = vunpack.c.l.bf16 %v604
    %v655 = vunpack.c.l.bf16 %v605
    %v656 = vunpack.c.l.bf16 %v606
    %v657 = vunpack.c.l.bf16 %v607
    %v658 = vunpack.c.l.bf16 %v608
    %v659 = vunpack.c.l.bf16 %v609
    %v660 = vunpack.c.l.bf16 %v610
    %v661 = vunpack.c.l.bf16 %v611
    %v662 = vunpack.c.l.bf16 %v612
    %v663 = vunpack.c.l.bf16 %v613
    %v664 = vunpack.c.l.bf16 %v614
    %v665 = vunpack.c.l.bf16 %v615
    %v666 = vunpack.c.l.bf16 %v616
    %v667 = vunpack.c.l.bf16 %v617
    %v668 = vunpack.c.l.bf16 %v618
    %v669 = vunpack.c.l.bf16 %v619
    %v670 = vunpack.c.l.bf16 %v620
    %v671 = vunpack.c.l.bf16 %v621
    %v672 = vunpack.c.l.bf16 %v622
    %v673 = vunpack.c.l.bf16 %v623
    %v674 = vunpack.c.l.bf16 %v624
    %v675 = vunpack.c.l.bf16 %v625
    %v676 = vunpack.c.l.bf16 %v626
    %v677 = vunpack.c.l.bf16 %v627
    %v678 = vunpack.c.l.bf16 %v628
    %v679 = vunpack.c.l.bf16 %v629
    %v680 = vunpack.c.l.bf16 %v630
    %v681 = vunpack.c.l.bf16 %v631
    %v682 = vunpack.c.l.bf16 %v632
    %v683 = vadd.f32 %v633, %v634
    %v684 = vadd.f32 %v683, %v635
    %v685 = vadd.f32 %v684, %v636
    %v686 = vadd.f32 %v685, %v637
    %v687 = vadd.f32 %v686, %v638
    %v688 = vadd.f32 %v687, %v639
    %v689 = vadd.f32 %v688, %v640
    %v690 = vadd.f32 %v689, %v641
    %v691 = vadd.f32 %v690, %v642
    %v692 = vadd.f32 %v691, %v643
    %v693 = vadd.f32 %v692, %v644
    %v694 = vadd.f32 %v693, %v645
    %v695 = vadd.f32 %v694, %v646
    %v696 = vadd.f32 %v695, %v647
    %v697 = vadd.f32 %v696, %v648
    %v698 = vadd.f32 %v697, %v649
    %v699 = vadd.f32 %v698, %v650
    %v700 = vadd.f32 %v699, %v651
    %v701 = vadd.f32 %v700, %v652
    %v702 = vadd.f32 %v701, %v653
    %v703 = vadd.f32 %v702, %v654
    %v704 = vadd.f32 %v703, %v655
    %v705 = vadd.f32 %v704, %v656
    %v706 = vadd.f32 %v705, %v657
    %v707 = vrot.slane %v706, 4
    %v708 = vadd.f32 %v706, %v707
    %v709 = vrot.slane %v708, 2
    %v710 = vadd.f32 %v708, %v709
    %v711 = vrot.slane %v710, 1
    %v712 = vadd.f32 %v710, %v711
    %v713 = vadd.f32 %v658, %v659
    %v714 = vadd.f32 %v713, %v660
    %v715 = vadd.f32 %v714, %v661
    %v716 = vadd.f32 %v715, %v662
    %v717 = vadd.f32 %v716, %v663
    %v718 = vadd.f32 %v717, %v664
    %v719 = vadd.f32 %v718, %v665
    %v720 = vadd.f32 %v719, %v666
    %v721 = vadd.f32 %v720, %v667
    %v722 = vadd.f32 %v721, %v668
    %v723 = vadd.f32 %v722, %v669
    %v724 = vadd.f32 %v723, %v670
    %v725 = vadd.f32 %v724, %v671
    %v726 = vadd.f32 %v725, %v672
    %v727 = vadd.f32 %v726, %v673
    %v728 = vadd.f32 %v727, %v674
    %v729 = vadd.f32 %v728, %v675
    %v730 = vadd.f32 %v729, %v676
    %v731 = vadd.f32 %v730, %v677
    %v732 = vadd.f32 %v731, %v678
    %v733 = vadd.f32 %v732, %v679
    %v734 = vadd.f32 %v733, %v680
    %v735 = vadd.f32 %v734, %v681
    %v736 = vadd.f32 %v735, %v682
    %v737 = vrot.slane %v736, 4
    %v738 = vadd.f32 %v736, %v737
    %v739 = vrot.slane %v738, 2
    %v740 = vadd.f32 %v738, %v739
    %v741 = vrot.slane %v740, 1
    %v742 = vadd.f32 %v740, %v741
    %v743 = vpack.c.bf16 %v712, %v712
    %v744 = vpack.c.bf16 %v742, %v742
    %v745 = vld [vmem:[#allocation11] sm:$0xf]
    %v746 = vld [vmem:[#allocation11 + $0x4] sm:$0xf]
    %v747 = vld [vmem:[#allocation11 + $0x8] sm:$0xf]
    %v748 = vld [vmem:[#allocation11 + $0xc] sm:$0xf]
    %v749 = vld [vmem:[#allocation11 + $0x10] sm:$0xf]
    %v750 = vld [vmem:[#allocation11 + $0x14] sm:$0xf]
    %v751 = vld [vmem:[#allocation11 + $0x18] sm:$0xf]
    %v752 = vld [vmem:[#allocation11 + $0x1c] sm:$0xf]
    %v753 = vld [vmem:[#allocation11 + $0x20] sm:$0xf]
    %v754 = vld [vmem:[#allocation11 + $0x24] sm:$0xf]
    %v755 = vld [vmem:[#allocation11 + $0x28] sm:$0xf]
    %v756 = vld [vmem:[#allocation11 + $0x2c] sm:$0xf]
    %v757 = vld [vmem:[#allocation11 + $0x30] sm:$0xf]
    %v758 = vld [vmem:[#allocation11 + $0x34] sm:$0xf]
    %v759 = vld [vmem:[#allocation11 + $0x38] sm:$0xf]
    %v760 = vld [vmem:[#allocation11 + $0x3c] sm:$0xf]
    %v761 = vld [vmem:[%s8 + $0x1] sm:$0x1]
    %v762 = vlaneseq
    %v763 = vshrl.u32 %v762, 7
    %v764 = vsub.s32 0, %v763
    %v765 = vrot.slane %v761, %v764
    %v768 = vunpack.c.l.b16 %v743
    %v769 = vunpack.c.l.b16 %v744
    %v770 = vsel %vm480, %v769, %v768
    %v771 = vpack.c.b16 %v770, %v770
    %v789 = vunpack.c.l.b16 %v745
    %v790 = vunpack.c.l.b16 %v746
    %v791 = vunpack.c.l.b16 %v747
    %v792 = vunpack.c.l.b16 %v748
    %v793 = vunpack.c.l.b16 %v749
    %v794 = vunpack.c.l.b16 %v750
    %v795 = vunpack.c.l.b16 %v751
    %v796 = vunpack.c.l.b16 %v752
    %v797 = vunpack.c.l.b16 %v753
    %v798 = vunpack.c.l.b16 %v754
    %v799 = vunpack.c.l.b16 %v755
    %v800 = vunpack.c.l.b16 %v756
    %v801 = vunpack.c.l.b16 %v757
    %v802 = vunpack.c.l.b16 %v758
    %v803 = vunpack.c.l.b16 %v759
    %v804 = vunpack.c.l.b16 %v760
    %v805 = vpack.c.b16 %v790, %v789
    %v806 = vpack.c.b16 %v792, %v791
    %v807 = vpack.c.b16 %v794, %v793
    %v808 = vpack.c.b16 %v796, %v795
    %v809 = vpack.c.b16 %v798, %v797
    %v810 = vpack.c.b16 %v800, %v799
    %v811 = vpack.c.b16 %v802, %v801
    %v812 = vpack.c.b16 %v804, %v803
    %821 = vmatprep.subr.bf16.mxu0 0
    %822 = vmatpush1.bf16.msra.mxu0 %v812
    %823 = vmatprep.subr.bf16.mxu0 0
    %824 = vmatpush1.bf16.msra.mxu0 %v811
    %825 = vmatprep.subr.bf16.mxu0 0
    %826 = vmatpush1.bf16.msra.mxu0 %v810
    %827 = vmatprep.subr.bf16.mxu0 0
    %828 = vmatpush1.bf16.msra.mxu0 %v809
    %829 = vmatprep.subr.bf16.mxu0 0
    %830 = vmatpush1.bf16.msra.mxu0 %v808
    %831 = vmatprep.subr.bf16.mxu0 0
    %832 = vmatpush1.bf16.msra.mxu0 %v807
    %833 = vmatprep.subr.bf16.mxu0 0
    %834 = vmatpush1.bf16.msra.mxu0 %v806
    %835 = vmatprep.subr.bf16.mxu0 0
    %836 = vmatpush1.bf16.msra.mxu0 %v805
    %837 = vmatprep.subr.bf16.mxu0 0
    %838 = vmatpush2.bf16.msra.mxu0 0
    %839 = vmatprep.subr.bf16.mxu0 0
    %840 = vmatpush2.bf16.msra.mxu0 0
    %841 = vmatprep.subr.bf16.mxu0 0
    %842 = vmatpush2.bf16.msra.mxu0 0
    %843 = vmatprep.subr.bf16.mxu0 0
    %844 = vmatpush2.bf16.msra.mxu0 0
    %845 = vmatprep.subr.bf16.mxu0 0
    %846 = vmatpush2.bf16.msra.mxu0 0
    %847 = vmatprep.subr.bf16.mxu0 0
    %848 = vmatpush2.bf16.msra.mxu0 0
    %849 = vmatprep.subr.bf16.mxu0 0
    %850 = vmatpush2.bf16.msra.mxu0 0
    %851 = vmatprep.subr.bf16.mxu0 0
    %852 = vmatpush2.bf16.msra.mxu0 0
    %853 = vmatprep.mubr.bf16.mxu0 0
    %854 = vmatmul.mubr.bf16.gmra.mxu0 %v771
    %v855 = vpop.f32.mrf.mxu0
    %v856 = vadd.f32 %v765, %v855
    %v857 = vpop.f32.mrf.mxu0
    %v858 = vpop.f32.mrf.mxu0
    %v859 = vpop.f32.mrf.mxu0
    %860 = vdwg.mxu0
    %v861 = vmax.f32 %v856, 0.0
    %v862 = vld [vmem:[%s9 + $0x1] sm:$0x1]
    %v863 = vlaneseq
    %v864 = vshrl.u32 %v863, 7
    %v865 = vsub.s32 0, %v864
    %v866 = vrot.slane %v862, %v865
    %v867 = vmul.f32 %v861, %v866
    %v868 = vsel %vm579, %v867, 0.0
    %869 = vadd.xlane.f32.xlu0 %v868
    %v870 = vpop.xlane.xlu0 %869
    %v871 = vadd.f32 %v582, %v870
    %v872 = vld [vmem:[#allocation7] sm:$0xff]
    %v873 = vld [vmem:[#allocation7 + $0x8] sm:$0xff]
    %v874 = vld [vmem:[#allocation7 + $0x10] sm:$0xff]
    %v875 = vld [vmem:[#allocation7 + $0x18] sm:$0xff]
    %v876 = vld [vmem:[#allocation7 + $0x20] sm:$0xff]
    %v877 = vld [vmem:[#allocation7 + $0x28] sm:$0xff]
    %v878 = vld [vmem:[#allocation7 + $0x30] sm:$0xff]
    %v879 = vld [vmem:[#allocation7 + $0x38] sm:$0xff]
    %v880 = vld [vmem:[#allocation7 + $0x40] sm:$0xff]
    %v881 = vld [vmem:[#allocation7 + $0x48] sm:$0xff]
    %v882 = vld [vmem:[#allocation7 + $0x50] sm:$0xff]
    %v883 = vld [vmem:[#allocation7 + $0x58] sm:$0xff]
    %v884 = vld [vmem:[#allocation7 + $0x60] sm:$0xff]
    %v885 = vld [vmem:[#allocation7 + $0x68] sm:$0xff]
    %v886 = vunpack.c.l.bf16 %v872
    %v887 = vunpack.c.h.bf16 %v872
    %v888 = vunpack.c.l.bf16 %v873
    %v889 = vunpack.c.h.bf16 %v873
    %v890 = vunpack.c.l.bf16 %v874
    %v891 = vunpack.c.h.bf16 %v874
    %v892 = vunpack.c.l.bf16 %v875
    %v893 = vunpack.c.h.bf16 %v875
    %v894 = vunpack.c.l.bf16 %v876
    %v895 = vunpack.c.h.bf16 %v876
    %v896 = vunpack.c.l.bf16 %v877
    %v897 = vunpack.c.h.bf16 %v877
    %v898 = vunpack.c.l.bf16 %v878
    %v899 = vunpack.c.h.bf16 %v878
    %v900 = vunpack.c.l.bf16 %v879
    %v901 = vunpack.c.h.bf16 %v879
    %v902 = vunpack.c.l.bf16 %v880
    %v903 = vunpack.c.h.bf16 %v880
    %v904 = vunpack.c.l.bf16 %v881
    %v905 = vunpack.c.h.bf16 %v881
    %v906 = vunpack.c.l.bf16 %v882
    %v907 = vunpack.c.h.bf16 %v882
    %v908 = vunpack.c.l.bf16 %v883
    %v909 = vunpack.c.h.bf16 %v883
    %v910 = vunpack.c.l.bf16 %v884
    %v911 = vunpack.c.h.bf16 %v884
    %v912 = vunpack.c.l.bf16 %v885
    %v913 = vunpack.c.h.bf16 %v885
    %v914 = vadd.f32 %v886, %v888
    %v915 = vadd.f32 %v914, %v890
    %v916 = vadd.f32 %v915, %v892
    %v917 = vadd.f32 %v916, %v894
    %v918 = vadd.f32 %v917, %v896
    %v919 = vadd.f32 %v918, %v898
    %v920 = vrot.slane %v919, 4
    %v921 = vadd.f32 %v919, %v920
    %v922 = vrot.slane %v921, 2
    %v923 = vadd.f32 %v921, %v922
    %v924 = vrot.slane %v923, 1
    %v925 = vadd.f32 %v923, %v924
    %v926 = vadd.f32 %v887, %v889
    %v927 = vadd.f32 %v926, %v891
    %v928 = vadd.f32 %v927, %v893
    %v929 = vadd.f32 %v928, %v895
    %v930 = vadd.f32 %v929, %v897
    %v931 = vadd.f32 %v930, %v899
    %v932 = vrot.slane %v931, 4
    %v933 = vadd.f32 %v931, %v932
    %v934 = vrot.slane %v933, 2
    %v935 = vadd.f32 %v933, %v934
    %v936 = vrot.slane %v935, 1
    %v937 = vadd.f32 %v935, %v936
    %v938 = vadd.f32 %v900, %v902
    %v939 = vadd.f32 %v938, %v904
    %v940 = vadd.f32 %v939, %v906
    %v941 = vadd.f32 %v940, %v908
    %v942 = vadd.f32 %v941, %v910
    %v943 = vadd.f32 %v942, %v912
    %v944 = vrot.slane %v943, 4
    %v945 = vadd.f32 %v943, %v944
    %v946 = vrot.slane %v945, 2
    %v947 = vadd.f32 %v945, %v946
    %v948 = vrot.slane %v947, 1
    %v949 = vadd.f32 %v947, %v948
    %v950 = vadd.f32 %v901, %v903
    %v951 = vadd.f32 %v950, %v905
    %v952 = vadd.f32 %v951, %v907
    %v953 = vadd.f32 %v952, %v909
    %v954 = vadd.f32 %v953, %v911
    %v955 = vadd.f32 %v954, %v913
    %v956 = vrot.slane %v955, 4
    %v957 = vadd.f32 %v955, %v956
    %v958 = vrot.slane %v957, 2
    %v959 = vadd.f32 %v957, %v958
    %v960 = vrot.slane %v959, 1
    %v961 = vadd.f32 %v959, %v960
    %v962 = vpack.c.bf16 %v925, %v925
    %v963 = vpack.c.bf16 %v937, %v937
    %v964 = vpack.c.bf16 %v949, %v949
    %v965 = vpack.c.bf16 %v961, %v961
    %v966 = vld [vmem:[#allocation13] sm:$0xf]
    %v967 = vld [vmem:[#allocation13 + $0x4] sm:$0xf]
    %v968 = vld [vmem:[#allocation13 + $0x8] sm:$0xf]
    %v969 = vld [vmem:[#allocation13 + $0xc] sm:$0xf]
    %v970 = vld [vmem:[#allocation13 + $0x10] sm:$0xf]
    %v971 = vld [vmem:[#allocation13 + $0x14] sm:$0xf]
    %v972 = vld [vmem:[#allocation13 + $0x18] sm:$0xf]
    %v973 = vld [vmem:[#allocation13 + $0x1c] sm:$0xf]
    %v974 = vld [vmem:[#allocation13 + $0x20] sm:$0xf]
    %v975 = vld [vmem:[#allocation13 + $0x24] sm:$0xf]
    %v976 = vld [vmem:[#allocation13 + $0x28] sm:$0xf]
    %v977 = vld [vmem:[#allocation13 + $0x2c] sm:$0xf]
    %v978 = vld [vmem:[#allocation13 + $0x30] sm:$0xf]
    %v979 = vld [vmem:[#allocation13 + $0x34] sm:$0xf]
    %v980 = vld [vmem:[#allocation13 + $0x38] sm:$0xf]
    %v981 = vld [vmem:[#allocation13 + $0x3c] sm:$0xf]
    %v982 = vld [vmem:[#allocation13 + $0x40] sm:$0xf]
    %v983 = vld [vmem:[#allocation13 + $0x44] sm:$0xf]
    %v984 = vld [vmem:[#allocation13 + $0x48] sm:$0xf]
    %v985 = vld [vmem:[#allocation13 + $0x4c] sm:$0xf]
    %v986 = vld [vmem:[#allocation13 + $0x50] sm:$0xf]
    %v987 = vld [vmem:[#allocation13 + $0x54] sm:$0xf]
    %v988 = vld [vmem:[#allocation13 + $0x58] sm:$0xf]
    %v989 = vld [vmem:[#allocation13 + $0x5c] sm:$0xf]
    %v990 = vld [vmem:[#allocation13 + $0x60] sm:$0xf]
    %v991 = vld [vmem:[#allocation13 + $0x64] sm:$0xf]
    %v992 = vld [vmem:[#allocation13 + $0x68] sm:$0xf]
    %v993 = vld [vmem:[#allocation13 + $0x6c] sm:$0xf]
    %v994 = vld [vmem:[#allocation13 + $0x70] sm:$0xf]
    %v995 = vld [vmem:[#allocation13 + $0x74] sm:$0xf]
    %v996 = vld [vmem:[#allocation13 + $0x78] sm:$0xf]
    %v997 = vld [vmem:[#allocation13 + $0x7c] sm:$0xf]
    %v998 = vld [vmem:[%s8 + $0x2] sm:$0x1]
    %v999 = vlaneseq
    %v1000 = vshrl.u32 %v999, 7
    %v1001 = vsub.s32 0, %v1000
    %v1002 = vrot.slane %v998, %v1001
    %v1007 = vunpack.c.l.b16 %v962
    %v1008 = vunpack.c.l.b16 %v963
    %v1009 = vunpack.c.l.b16 %v964
    %v1010 = vunpack.c.l.b16 %v965
    %v1011 = vsel %vm480, %v1009, %v1007
    %v1012 = vsel %vm480, %v1010, %v1008
    %v1013 = vpack.c.b16 %v1011, %v1011
    %v1014 = vpack.c.b16 %v1012, %v1012
    %v1049 = vunpack.c.l.b16 %v966
    %v1050 = vunpack.c.l.b16 %v967
    %v1051 = vunpack.c.l.b16 %v968
    %v1052 = vunpack.c.l.b16 %v969
    %v1053 = vunpack.c.l.b16 %v970
    %v1054 = vunpack.c.l.b16 %v971
    %v1055 = vunpack.c.l.b16 %v972
    %v1056 = vunpack.c.l.b16 %v973
    %v1057 = vunpack.c.l.b16 %v974
    %v1058 = vunpack.c.l.b16 %v975
    %v1059 = vunpack.c.l.b16 %v976
    %v1060 = vunpack.c.l.b16 %v977
    %v1061 = vunpack.c.l.b16 %v978
    %v1062 = vunpack.c.l.b16 %v979
    %v1063 = vunpack.c.l.b16 %v980
    %v1064 = vunpack.c.l.b16 %v981
    %v1065 = vunpack.c.l.b16 %v982
    %v1066 = vunpack.c.l.b16 %v983
    %v1067 = vunpack.c.l.b16 %v984
    %v1068 = vunpack.c.l.b16 %v985
    %v1069 = vunpack.c.l.b16 %v986
    %v1070 = vunpack.c.l.b16 %v987
    %v1071 = vunpack.c.l.b16 %v988
    %v1072 = vunpack.c.l.b16 %v989
    %v1073 = vunpack.c.l.b16 %v990
    %v1074 = vunpack.c.l.b16 %v991
    %v1075 = vunpack.c.l.b16 %v992
    %v1076 = vunpack.c.l.b16 %v993
    %v1077 = vunpack.c.l.b16 %v994
    %v1078 = vunpack.c.l.b16 %v995
    %v1079 = vunpack.c.l.b16 %v996
    %v1080 = vunpack.c.l.b16 %v997
    %v1081 = vpack.c.b16 %v1050, %v1049
    %v1082 = vpack.c.b16 %v1052, %v1051
    %v1083 = vpack.c.b16 %v1054, %v1053
    %v1084 = vpack.c.b16 %v1056, %v1055
    %v1085 = vpack.c.b16 %v1058, %v1057
    %v1086 = vpack.c.b16 %v1060, %v1059
    %v1087 = vpack.c.b16 %v1062, %v1061
    %v1088 = vpack.c.b16 %v1064, %v1063
    %v1089 = vpack.c.b16 %v1066, %v1065
    %v1090 = vpack.c.b16 %v1068, %v1067
    %v1091 = vpack.c.b16 %v1070, %v1069
    %v1092 = vpack.c.b16 %v1072, %v1071
    %v1093 = vpack.c.b16 %v1074, %v1073
    %v1094 = vpack.c.b16 %v1076, %v1075
    %v1095 = vpack.c.b16 %v1078, %v1077
    %v1096 = vpack.c.b16 %v1080, %v1079
    %1113 = vmatprep.subr.bf16.mxu0 0
    %1114 = vmatpush1.bf16.msra.mxu0 %v1088
    %1115 = vmatprep.subr.bf16.mxu0 0
    %1116 = vmatpush1.bf16.msra.mxu0 %v1087
    %1117 = vmatprep.subr.bf16.mxu0 0
    %1118 = vmatpush1.bf16.msra.mxu0 %v1086
    %1119 = vmatprep.subr.bf16.mxu0 0
    %1120 = vmatpush1.bf16.msra.mxu0 %v1085
    %1121 = vmatprep.subr.bf16.mxu0 0
    %1122 = vmatpush1.bf16.msra.mxu0 %v1084
    %1123 = vmatprep.subr.bf16.mxu0 0
    %1124 = vmatpush1.bf16.msra.mxu0 %v1083
    %1125 = vmatprep.subr.bf16.mxu0 0
    %1126 = vmatpush1.bf16.msra.mxu0 %v1082
    %1127 = vmatprep.subr.bf16.mxu0 0
    %1128 = vmatpush1.bf16.msra.mxu0 %v1081
    %1129 = vmatprep.subr.bf16.mxu0 0
    %1130 = vmatpush2.bf16.msra.mxu0 %v1096
    %1131 = vmatprep.subr.bf16.mxu0 0
    %1132 = vmatpush2.bf16.msra.mxu0 %v1095
    %1133 = vmatprep.subr.bf16.mxu0 0
    %1134 = vmatpush2.bf16.msra.mxu0 %v1094
    %1135 = vmatprep.subr.bf16.mxu0 0
    %1136 = vmatpush2.bf16.msra.mxu0 %v1093
    %1137 = vmatprep.subr.bf16.mxu0 0
    %1138 = vmatpush2.bf16.msra.mxu0 %v1092
    %1139 = vmatprep.subr.bf16.mxu0 0
    %1140 = vmatpush2.bf16.msra.mxu0 %v1091
    %1141 = vmatprep.subr.bf16.mxu0 0
    %1142 = vmatpush2.bf16.msra.mxu0 %v1090
    %1143 = vmatprep.subr.bf16.mxu0 0
    %1144 = vmatpush2.bf16.msra.mxu0 %v1089
    %1145 = vmatprep.mubr.bf16.mxu0 %v1014
    %1146 = vmatmul.mubr.bf16.gmra.mxu0 %v1013
    %v1147 = vpop.f32.mrf.mxu0
    %v1148 = vadd.f32 %v1002, %v1147
    %v1149 = vpop.f32.mrf.mxu0
    %v1150 = vpop.f32.mrf.mxu0
    %v1151 = vpop.f32.mrf.mxu0
    %1152 = vdwg.mxu0
    %v1153 = vmax.f32 %v1148, 0.0
    %v1154 = vld [vmem:[%s9 + $0x2] sm:$0x1]
    %v1155 = vlaneseq
    %v1156 = vshrl.u32 %v1155, 7
    %v1157 = vsub.s32 0, %v1156
    %v1158 = vrot.slane %v1154, %v1157
    %v1159 = vmul.f32 %v1153, %v1158
    %v1160 = vsel %vm579, %v1159, 0.0
    %1161 = vadd.xlane.f32.xlu0 %v1160
    %v1162 = vpop.xlane.xlu0 %1161
    %v1163 = vadd.f32 %v871, %v1162
    %v1164 = vld [vmem:[#allocation8] sm:$0xff]
    %v1165 = vld [vmem:[#allocation8 + $0x8] sm:$0xff]
    %v1166 = vld [vmem:[#allocation8 + $0x10] sm:$0xff]
    %v1167 = vld [vmem:[#allocation8 + $0x18] sm:$0xff]
    %v1168 = vld [vmem:[#allocation8 + $0x20] sm:$0xff]
    %v1169 = vld [vmem:[#allocation8 + $0x28] sm:$0xff]
    %v1170 = vld [vmem:[#allocation8 + $0x30] sm:$0xff]
    %v1171 = vld [vmem:[#allocation8 + $0x38] sm:$0xff]
    %v1172 = vunpack.c.l.bf16 %v1164
    %v1173 = vunpack.c.h.bf16 %v1164
    %v1174 = vunpack.c.l.bf16 %v1165
    %v1175 = vunpack.c.h.bf16 %v1165
    %v1176 = vunpack.c.l.bf16 %v1166
    %v1177 = vunpack.c.h.bf16 %v1166
    %v1178 = vunpack.c.l.bf16 %v1167
    %v1179 = vunpack.c.h.bf16 %v1167
    %v1180 = vunpack.c.l.bf16 %v1168
    %v1181 = vunpack.c.h.bf16 %v1168
    %v1182 = vunpack.c.l.bf16 %v1169
    %v1183 = vunpack.c.h.bf16 %v1169
    %v1184 = vunpack.c.l.bf16 %v1170
    %v1185 = vunpack.c.h.bf16 %v1170
    %v1186 = vunpack.c.l.bf16 %v1171
    %v1187 = vunpack.c.h.bf16 %v1171
    %v1188 = vadd.f32 %v1172, %v1176
    %v1189 = vrot.slane %v1188, 4
    %v1190 = vadd.f32 %v1188, %v1189
    %v1191 = vrot.slane %v1190, 2
    %v1192 = vadd.f32 %v1190, %v1191
    %v1193 = vrot.slane %v1192, 1
    %v1194 = vadd.f32 %v1192, %v1193
    %v1195 = vadd.f32 %v1173, %v1177
    %v1196 = vrot.slane %v1195, 4
    %v1197 = vadd.f32 %v1195, %v1196
    %v1198 = vrot.slane %v1197, 2
    %v1199 = vadd.f32 %v1197, %v1198
    %v1200 = vrot.slane %v1199, 1
    %v1201 = vadd.f32 %v1199, %v1200
    %v1202 = vadd.f32 %v1174, %v1178
    %v1203 = vrot.slane %v1202, 4
    %v1204 = vadd.f32 %v1202, %v1203
    %v1205 = vrot.slane %v1204, 2
    %v1206 = vadd.f32 %v1204, %v1205
    %v1207 = vrot.slane %v1206, 1
    %v1208 = vadd.f32 %v1206, %v1207
    %v1209 = vadd.f32 %v1175, %v1179
    %v1210 = vrot.slane %v1209, 4
    %v1211 = vadd.f32 %v1209, %v1210
    %v1212 = vrot.slane %v1211, 2
    %v1213 = vadd.f32 %v1211, %v1212
    %v1214 = vrot.slane %v1213, 1
    %v1215 = vadd.f32 %v1213, %v1214
    %v1216 = vadd.f32 %v1180, %v1184
    %v1217 = vrot.slane %v1216, 4
    %v1218 = vadd.f32 %v1216, %v1217
    %v1219 = vrot.slane %v1218, 2
    %v1220 = vadd.f32 %v1218, %v1219
    %v1221 = vrot.slane %v1220, 1
    %v1222 = vadd.f32 %v1220, %v1221
    %v1223 = vadd.f32 %v1181, %v1185
    %v1224 = vrot.slane %v1223, 4
    %v1225 = vadd.f32 %v1223, %v1224
    %v1226 = vrot.slane %v1225, 2
    %v1227 = vadd.f32 %v1225, %v1226
    %v1228 = vrot.slane %v1227, 1
    %v1229 = vadd.f32 %v1227, %v1228
    %v1230 = vadd.f32 %v1182, %v1186
    %v1231 = vrot.slane %v1230, 4
    %v1232 = vadd.f32 %v1230, %v1231
    %v1233 = vrot.slane %v1232, 2
    %v1234 = vadd.f32 %v1232, %v1233
    %v1235 = vrot.slane %v1234, 1
    %v1236 = vadd.f32 %v1234, %v1235
    %v1237 = vadd.f32 %v1183, %v1187
    %v1238 = vrot.slane %v1237, 4
    %v1239 = vadd.f32 %v1237, %v1238
    %v1240 = vrot.slane %v1239, 2
    %v1241 = vadd.f32 %v1239, %v1240
    %v1242 = vrot.slane %v1241, 1
    %v1243 = vadd.f32 %v1241, %v1242
    %v1244 = vpack.c.bf16 %v1194, %v1194
    %v1245 = vpack.c.bf16 %v1201, %v1201
    %v1246 = vpack.c.bf16 %v1208, %v1208
    %v1247 = vpack.c.bf16 %v1215, %v1215
    %v1248 = vpack.c.bf16 %v1222, %v1222
    %v1249 = vpack.c.bf16 %v1229, %v1229
    %v1250 = vpack.c.bf16 %v1236, %v1236
    %v1251 = vpack.c.bf16 %v1243, %v1243
    %v1252 = vld [vmem:[#allocation14] sm:$0xf]
    %v1253 = vld [vmem:[#allocation14 + $0x4] sm:$0xf]
    %v1254 = vld [vmem:[#allocation14 + $0x8] sm:$0xf]
    %v1255 = vld [vmem:[#allocation14 + $0xc] sm:$0xf]
    %v1256 = vld [vmem:[#allocation14 + $0x10] sm:$0xf]
    %v1257 = vld [vmem:[#allocation14 + $0x14] sm:$0xf]
    %v1258 = vld [vmem:[#allocation14 + $0x18] sm:$0xf]
    %v1259 = vld [vmem:[#allocation14 + $0x1c] sm:$0xf]
    %v1260 = vld [vmem:[#allocation14 + $0x20] sm:$0xf]
    %v1261 = vld [vmem:[#allocation14 + $0x24] sm:$0xf]
    %v1262 = vld [vmem:[#allocation14 + $0x28] sm:$0xf]
    %v1263 = vld [vmem:[#allocation14 + $0x2c] sm:$0xf]
    %v1264 = vld [vmem:[#allocation14 + $0x30] sm:$0xf]
    %v1265 = vld [vmem:[#allocation14 + $0x34] sm:$0xf]
    %v1266 = vld [vmem:[#allocation14 + $0x38] sm:$0xf]
    %v1267 = vld [vmem:[#allocation14 + $0x3c] sm:$0xf]
    %v1268 = vld [vmem:[#allocation14 + $0x40] sm:$0xf]
    %v1269 = vld [vmem:[#allocation14 + $0x44] sm:$0xf]
    %v1270 = vld [vmem:[#allocation14 + $0x48] sm:$0xf]
    %v1271 = vld [vmem:[#allocation14 + $0x4c] sm:$0xf]
    %v1272 = vld [vmem:[#allocation14 + $0x50] sm:$0xf]
    %v1273 = vld [vmem:[#allocation14 + $0x54] sm:$0xf]
    %v1274 = vld [vmem:[#allocation14 + $0x58] sm:$0xf]
    %v1275 = vld [vmem:[#allocation14 + $0x5c] sm:$0xf]
    %v1276 = vld [vmem:[#allocation14 + $0x60] sm:$0xf]
    %v1277 = vld [vmem:[#allocation14 + $0x64] sm:$0xf]
    %v1278 = vld [vmem:[#allocation14 + $0x68] sm:$0xf]
    %v1279 = vld [vmem:[#allocation14 + $0x6c] sm:$0xf]
    %v1280 = vld [vmem:[#allocation14 + $0x70] sm:$0xf]
    %v1281 = vld [vmem:[#allocation14 + $0x74] sm:$0xf]
    %v1282 = vld [vmem:[#allocation14 + $0x78] sm:$0xf]
    %v1283 = vld [vmem:[#allocation14 + $0x7c] sm:$0xf]
    %v1284 = vld [vmem:[#allocation14 + $0x80] sm:$0xf]
    %v1285 = vld [vmem:[#allocation14 + $0x84] sm:$0xf]
    %v1286 = vld [vmem:[#allocation14 + $0x88] sm:$0xf]
    %v1287 = vld [vmem:[#allocation14 + $0x8c] sm:$0xf]
    %v1288 = vld [vmem:[#allocation14 + $0x90] sm:$0xf]
    %v1289 = vld [vmem:[#allocation14 + $0x94] sm:$0xf]
    %v1290 = vld [vmem:[#allocation14 + $0x98] sm:$0xf]
    %v1291 = vld [vmem:[#allocation14 + $0x9c] sm:$0xf]
    %v1292 = vld [vmem:[#allocation14 + $0xa0] sm:$0xf]
    %v1293 = vld [vmem:[#allocation14 + $0xa4] sm:$0xf]
    %v1294 = vld [vmem:[#allocation14 + $0xa8] sm:$0xf]
    %v1295 = vld [vmem:[#allocation14 + $0xac] sm:$0xf]
    %v1296 = vld [vmem:[#allocation14 + $0xb0] sm:$0xf]
    %v1297 = vld [vmem:[#allocation14 + $0xb4] sm:$0xf]
    %v1298 = vld [vmem:[#allocation14 + $0xb8] sm:$0xf]
    %v1299 = vld [vmem:[#allocation14 + $0xbc] sm:$0xf]
    %v1300 = vld [vmem:[#allocation14 + $0xc0] sm:$0xf]
    %v1301 = vld [vmem:[#allocation14 + $0xc4] sm:$0xf]
    %v1302 = vld [vmem:[#allocation14 + $0xc8] sm:$0xf]
    %v1303 = vld [vmem:[#allocation14 + $0xcc] sm:$0xf]
    %v1304 = vld [vmem:[#allocation14 + $0xd0] sm:$0xf]
    %v1305 = vld [vmem:[#allocation14 + $0xd4] sm:$0xf]
    %v1306 = vld [vmem:[#allocation14 + $0xd8] sm:$0xf]
    %v1307 = vld [vmem:[#allocation14 + $0xdc] sm:$0xf]
    %v1308 = vld [vmem:[#allocation14 + $0xe0] sm:$0xf]
    %v1309 = vld [vmem:[#allocation14 + $0xe4] sm:$0xf]
    %v1310 = vld [vmem:[#allocation14 + $0xe8] sm:$0xf]
    %v1311 = vld [vmem:[#allocation14 + $0xec] sm:$0xf]
    %v1312 = vld [vmem:[#allocation14 + $0xf0] sm:$0xf]
    %v1313 = vld [vmem:[#allocation14 + $0xf4] sm:$0xf]
    %v1314 = vld [vmem:[#allocation14 + $0xf8] sm:$0xf]
    %v1315 = vld [vmem:[#allocation14 + $0xfc] sm:$0xf]
    %v1316 = vld [vmem:[%s8 + $0x3] sm:$0x1]
    %v1317 = vlaneseq
    %v1318 = vshrl.u32 %v1317, 7
    %v1319 = vsub.s32 0, %v1318
    %v1320 = vrot.slane %v1316, %v1319
    %v1329 = vunpack.c.l.b16 %v1244
    %v1330 = vunpack.c.l.b16 %v1245
    %v1331 = vunpack.c.l.b16 %v1246
    %v1332 = vunpack.c.l.b16 %v1247
    %v1333 = vunpack.c.l.b16 %v1248
    %v1334 = vunpack.c.l.b16 %v1249
    %v1335 = vunpack.c.l.b16 %v1250
    %v1336 = vunpack.c.l.b16 %v1251
    %v1337 = vsel %vm480, %v1333, %v1329
    %v1338 = vsel %vm480, %v1334, %v1330
    %v1339 = vsel %vm480, %v1335, %v1331
    %v1340 = vsel %vm480, %v1336, %v1332
    %v1341 = vpack.c.b16 %v1337, %v1337
    %v1342 = vpack.c.b16 %v1338, %v1338
    %v1343 = vpack.c.b16 %v1339, %v1339
    %v1344 = vpack.c.b16 %v1340, %v1340
    %v1413 = vunpack.c.l.b16 %v1252
    %v1414 = vunpack.c.l.b16 %v1253
    %v1415 = vunpack.c.l.b16 %v1254
    %v1416 = vunpack.c.l.b16 %v1255
    %v1417 = vunpack.c.l.b16 %v1256
    %v1418 = vunpack.c.l.b16 %v1257
    %v1419 = vunpack.c.l.b16 %v1258
    %v1420 = vunpack.c.l.b16 %v1259
    %v1421 = vunpack.c.l.b16 %v1260
    %v1422 = vunpack.c.l.b16 %v1261
    %v1423 = vunpack.c.l.b16 %v1262
    %v1424 = vunpack.c.l.b16 %v1263
    %v1425 = vunpack.c.l.b16 %v1264
    %v1426 = vunpack.c.l.b16 %v1265
    %v1427 = vunpack.c.l.b16 %v1266
    %v1428 = vunpack.c.l.b16 %v1267
    %v1429 = vunpack.c.l.b16 %v1268
    %v1430 = vunpack.c.l.b16 %v1269
    %v1431 = vunpack.c.l.b16 %v1270
    %v1432 = vunpack.c.l.b16 %v1271
    %v1433 = vunpack.c.l.b16 %v1272
    %v1434 = vunpack.c.l.b16 %v1273
    %v1435 = vunpack.c.l.b16 %v1274
    %v1436 = vunpack.c.l.b16 %v1275
    %v1437 = vunpack.c.l.b16 %v1276
    %v1438 = vunpack.c.l.b16 %v1277
    %v1439 = vunpack.c.l.b16 %v1278
    %v1440 = vunpack.c.l.b16 %v1279
    %v1441 = vunpack.c.l.b16 %v1280
    %v1442 = vunpack.c.l.b16 %v1281
    %v1443 = vunpack.c.l.b16 %v1282
    %v1444 = vunpack.c.l.b16 %v1283
    %v1445 = vunpack.c.l.b16 %v1284
    %v1446 = vunpack.c.l.b16 %v1285
    %v1447 = vunpack.c.l.b16 %v1286
    %v1448 = vunpack.c.l.b16 %v1287
    %v1449 = vunpack.c.l.b16 %v1288
    %v1450 = vunpack.c.l.b16 %v1289
    %v1451 = vunpack.c.l.b16 %v1290
    %v1452 = vunpack.c.l.b16 %v1291
    %v1453 = vunpack.c.l.b16 %v1292
    %v1454 = vunpack.c.l.b16 %v1293
    %v1455 = vunpack.c.l.b16 %v1294
    %v1456 = vunpack.c.l.b16 %v1295
    %v1457 = vunpack.c.l.b16 %v1296
    %v1458 = vunpack.c.l.b16 %v1297
    %v1459 = vunpack.c.l.b16 %v1298
    %v1460 = vunpack.c.l.b16 %v1299
    %v1461 = vunpack.c.l.b16 %v1300
    %v1462 = vunpack.c.l.b16 %v1301
    %v1463 = vunpack.c.l.b16 %v1302
    %v1464 = vunpack.c.l.b16 %v1303
    %v1465 = vunpack.c.l.b16 %v1304
    %v1466 = vunpack.c.l.b16 %v1305
    %v1467 = vunpack.c.l.b16 %v1306
    %v1468 = vunpack.c.l.b16 %v1307
    %v1469 = vunpack.c.l.b16 %v1308
    %v1470 = vunpack.c.l.b16 %v1309
    %v1471 = vunpack.c.l.b16 %v1310
    %v1472 = vunpack.c.l.b16 %v1311
    %v1473 = vunpack.c.l.b16 %v1312
    %v1474 = vunpack.c.l.b16 %v1313
    %v1475 = vunpack.c.l.b16 %v1314
    %v1476 = vunpack.c.l.b16 %v1315
    %v1477 = vpack.c.b16 %v1414, %v1413
    %v1478 = vpack.c.b16 %v1416, %v1415
    %v1479 = vpack.c.b16 %v1418, %v1417
    %v1480 = vpack.c.b16 %v1420, %v1419
    %v1481 = vpack.c.b16 %v1422, %v1421
    %v1482 = vpack.c.b16 %v1424, %v1423
    %v1483 = vpack.c.b16 %v1426, %v1425
    %v1484 = vpack.c.b16 %v1428, %v1427
    %v1485 = vpack.c.b16 %v1430, %v1429
    %v1486 = vpack.c.b16 %v1432, %v1431
    %v1487 = vpack.c.b16 %v1434, %v1433
    %v1488 = vpack.c.b16 %v1436, %v1435
    %v1489 = vpack.c.b16 %v1438, %v1437
    %v1490 = vpack.c.b16 %v1440, %v1439
    %v1491 = vpack.c.b16 %v1442, %v1441
    %v1492 = vpack.c.b16 %v1444, %v1443
    %v1493 = vpack.c.b16 %v1446, %v1445
    %v1494 = vpack.c.b16 %v1448, %v1447
    %v1495 = vpack.c.b16 %v1450, %v1449
    %v1496 = vpack.c.b16 %v1452, %v1451
    %v1497 = vpack.c.b16 %v1454, %v1453
    %v1498 = vpack.c.b16 %v1456, %v1455
    %v1499 = vpack.c.b16 %v1458, %v1457
    %v1500 = vpack.c.b16 %v1460, %v1459
    %v1501 = vpack.c.b16 %v1462, %v1461
    %v1502 = vpack.c.b16 %v1464, %v1463
    %v1503 = vpack.c.b16 %v1466, %v1465
    %v1504 = vpack.c.b16 %v1468, %v1467
    %v1505 = vpack.c.b16 %v1470, %v1469
    %v1506 = vpack.c.b16 %v1472, %v1471
    %v1507 = vpack.c.b16 %v1474, %v1473
    %v1508 = vpack.c.b16 %v1476, %v1475
    %1541 = vmatprep.subr.bf16.mxu0 0
    %1542 = vmatpush1.bf16.msra.mxu0 %v1484
    %1543 = vmatprep.subr.bf16.mxu0 0
    %1544 = vmatpush1.bf16.msra.mxu0 %v1483
    %1545 = vmatprep.subr.bf16.mxu0 0
    %1546 = vmatpush1.bf16.msra.mxu0 %v1482
    %1547 = vmatprep.subr.bf16.mxu0 0
    %1548 = vmatpush1.bf16.msra.mxu0 %v1481
    %1549 = vmatprep.subr.bf16.mxu0 0
    %1550 = vmatpush1.bf16.msra.mxu0 %v1480
    %1551 = vmatprep.subr.bf16.mxu0 0
    %1552 = vmatpush1.bf16.msra.mxu0 %v1479
    %1553 = vmatprep.subr.bf16.mxu0 0
    %1554 = vmatpush1.bf16.msra.mxu0 %v1478
    %1555 = vmatprep.subr.bf16.mxu0 0
    %1556 = vmatpush1.bf16.msra.mxu0 %v1477
    %1557 = vmatprep.subr.bf16.mxu0 0
    %1558 = vmatpush2.bf16.msra.mxu0 %v1492
    %1559 = vmatprep.subr.bf16.mxu0 0
    %1560 = vmatpush2.bf16.msra.mxu0 %v1491
    %1561 = vmatprep.subr.bf16.mxu0 0
    %1562 = vmatpush2.bf16.msra.mxu0 %v1490
    %1563 = vmatprep.subr.bf16.mxu0 0
    %1564 = vmatpush2.bf16.msra.mxu0 %v1489
    %1565 = vmatprep.subr.bf16.mxu0 0
    %1566 = vmatpush2.bf16.msra.mxu0 %v1488
    %1567 = vmatprep.subr.bf16.mxu0 0
    %1568 = vmatpush2.bf16.msra.mxu0 %v1487
    %1569 = vmatprep.subr.bf16.mxu0 0
    %1570 = vmatpush2.bf16.msra.mxu0 %v1486
    %1571 = vmatprep.subr.bf16.mxu0 0
    %1572 = vmatpush2.bf16.msra.mxu0 %v1485
    %1573 = vmatprep.mubr.bf16.mxu0 %v1342
    %1574 = vmatmul.mubr.bf16.gmra.mxu0 %v1341
    %v1575 = vpop.f32.mrf.mxu0
    %v1576 = vadd.f32 %v1320, %v1575
    %v1577 = vpop.f32.mrf.mxu0
    %v1578 = vpop.f32.mrf.mxu0
    %v1579 = vpop.f32.mrf.mxu0
    %1580 = vdwg.mxu0
    %1581 = vmatprep.subr.bf16.mxu0 0
    %1582 = vmatpush1.bf16.msra.mxu0 %v1500
    %1583 = vmatprep.subr.bf16.mxu0 0
    %1584 = vmatpush1.bf16.msra.mxu0 %v1499
    %1585 = vmatprep.subr.bf16.mxu0 0
    %1586 = vmatpush1.bf16.msra.mxu0 %v1498
    %1587 = vmatprep.subr.bf16.mxu0 0
    %1588 = vmatpush1.bf16.msra.mxu0 %v1497
    %1589 = vmatprep.subr.bf16.mxu0 0
    %1590 = vmatpush1.bf16.msra.mxu0 %v1496
    %1591 = vmatprep.subr.bf16.mxu0 0
    %1592 = vmatpush1.bf16.msra.mxu0 %v1495
    %1593 = vmatprep.subr.bf16.mxu0 0
    %1594 = vmatpush1.bf16.msra.mxu0 %v1494
    %1595 = vmatprep.subr.bf16.mxu0 0
    %1596 = vmatpush1.bf16.msra.mxu0 %v1493
    %1597 = vmatprep.subr.bf16.mxu0 0
    %1598 = vmatpush2.bf16.msra.mxu0 %v1508
    %1599 = vmatprep.subr.bf16.mxu0 0
    %1600 = vmatpush2.bf16.msra.mxu0 %v1507
    %1601 = vmatprep.subr.bf16.mxu0 0
    %1602 = vmatpush2.bf16.msra.mxu0 %v1506
    %1603 = vmatprep.subr.bf16.mxu0 0
    %1604 = vmatpush2.bf16.msra.mxu0 %v1505
    %1605 = vmatprep.subr.bf16.mxu0 0
    %1606 = vmatpush2.bf16.msra.mxu0 %v1504
    %1607 = vmatprep.subr.bf16.mxu0 0
    %1608 = vmatpush2.bf16.msra.mxu0 %v1503
    %1609 = vmatprep.subr.bf16.mxu0 0
    %1610 = vmatpush2.bf16.msra.mxu0 %v1502
    %1611 = vmatprep.subr.bf16.mxu0 0
    %1612 = vmatpush2.bf16.msra.mxu0 %v1501
    %1613 = vmatprep.mubr.bf16.mxu0 %v1344
    %1614 = vmatmul.mubr.bf16.gmra.mxu0 %v1343
    %v1615 = vpop.f32.mrf.mxu0
    %v1616 = vadd.f32 %v1576, %v1615
    %v1617 = vpop.f32.mrf.mxu0
    %v1618 = vpop.f32.mrf.mxu0
    %v1619 = vpop.f32.mrf.mxu0
    %1620 = vdwg.mxu0
    %v1621 = vmax.f32 %v1616, 0.0
    %v1622 = vld [vmem:[%s9 + $0x3] sm:$0x1]
    %v1623 = vlaneseq
    %v1624 = vshrl.u32 %v1623, 7
    %v1625 = vsub.s32 0, %v1624
    %v1626 = vrot.slane %v1622, %v1625
    %v1627 = vmul.f32 %v1621, %v1626
    %v1628 = vsel %vm579, %v1627, 0.0
    %1629 = vadd.xlane.f32.xlu0 %v1628
    %v1630 = vpop.xlane.xlu0 %1629
    %v1631 = vadd.f32 %v1163, %v1630
    %s1632 = sld [smem:[#allocation2]]
    %v1633 = vstv %s1632
    %v1634 = vadd.f32 %v1631, %v1633
    %vm1635 = vcmask 1024
    %1636 = vst.msk [vmem:[%s11] sm:$0x3] %vm1635, %v1634
    // Predicated region
    $region78: #{tpu_custom_call.1} parent=1 // pred_check
      _
    $region79: #{tpu_custom_call.1} parent=1 // pred_check_branch
      %1638 = sbr.rel (0) target = $region81
    $region80: #{tpu_custom_call.1} parent=1 // pred_region
      _
    $region81: #{tpu_custom_call.1} parent=1 // pred_fallthru
      _
    // Predicated region
    $region82: #{tpu_custom_call.1} parent=1 // pred_check
      _
    $region83: #{tpu_custom_call.1} parent=1 // pred_check_branch
      %1640 = sbr.rel (0) target = $region85
    $region84: #{tpu_custom_call.1} parent=1 // pred_region
      _
    $region85: #{tpu_custom_call.1} parent=1 // pred_fallthru
      _
    %1641 = vsyncpa [#allocation4], 1
    %1642 = vsyncpa [#allocation6], 1
    %1643 = vsyncpa [#allocation9], 1
    %1644 = vsyncpa [#allocation12], 1
    %1645 = vsyncpa [#allocation15], 1

</llo_original>
